<compile_context>
chip_gen: v6e
topology: v6e:2x2x1
jax: 0.10.0
libtpu: 0.0.40
codegen_flags: <defaults>
</compile_context>

<pallas_src>
import functools

import jax
import jax.numpy as jnp
from jax import lax
from jax.experimental import pallas as pl
from jax.experimental.pallas import tpu as pltpu


_TILE_M = 512  # lane-axis tile: multiple of 128, small vs VMEM budget


def _choose_tile_m(m):
    # Single full block when small (always a legal block shape); otherwise 512.
    return m if m <= _TILE_M else _TILE_M


_PARALLEL = pltpu.CompilerParams(dimension_semantics=("parallel",))
_ARBITRARY = pltpu.CompilerParams(dimension_semantics=("arbitrary",))


# ---------------------------------------------------------------------------
# Pallas kernels (transposed, lane-dense layout: activations are (C, M))
# ---------------------------------------------------------------------------
def _conv_bn_relu_kernel(pT_ref, w_ref, b_ref, oT_ref):
    # oT = relu(W_scaled @ P^T + shift)        [conv1 + folded BN + ReLU]
    y = jnp.dot(w_ref[...], pT_ref[...], preferred_element_type=jnp.float32)
    oT_ref[...] = jnp.maximum(y + b_ref[...], 0.0)


def _conv_kernel(pT_ref, w_ref, oT_ref):
    # oT = W @ P^T                              [conv2: no BN, no activation]
    oT_ref[...] = jnp.dot(w_ref[...], pT_ref[...],
                          preferred_element_type=jnp.float32)


def _res_stack_kernel(xp_ref, mask_ref, w3_ref, b1_ref, w1_ref, b2_ref, o_ref, buf,
                      *, n_blocks, s_off, wp, l_len, n_ch):
    """All residual blocks fused; activation stays in the VMEM scratch `buf`.

    Padded-flat layout: positions q = n*Hp*Wp + ip*Wp + jp, pads (border rows/cols of
    each image) are zero.  `buf` = [s_off zeros | activation (l_len) | s_off zeros],
    so the 3x3 neighbourhood of every valid q is the static lane slice
    buf[:, s_off + dh*Wp + dw : ... + l_len].
    """
    buf[...] = jnp.zeros_like(buf)
    buf[:, s_off:s_off + l_len] = xp_ref[...]
    mask = mask_ref[...]                                      # (1, l_len) interior mask
    for r in range(n_blocks):
        # relu(x); halo/pads are 0 and stay 0 under relu.
        p_ext = jnp.maximum(buf[...], 0.0).astype(jnp.bfloat16)
        acc = jnp.zeros((n_ch, l_len), jnp.float32)
        tap = 0
        for dh in (-1, 0, 1):
            for dw in (-1, 0, 1):
                off = s_off + dh * wp + dw                    # static Python int
                acc = acc + jnp.dot(w3_ref[r * 9 + tap],
                                    p_ext[:, off:off + l_len],
                                    preferred_element_type=jnp.float32)
                tap += 1
        # BN1 shift + ReLU, then 1x1 conv (+BN2 shift) + residual, re-mask pads to 0.
        h = jnp.maximum(acc + b1_ref[r], 0.0).astype(jnp.bfloat16)
        y = jnp.dot(w1_ref[r], h, preferred_element_type=jnp.float32)
        y = (y + b2_ref[r] + buf[:, s_off:s_off + l_len]) * mask
        buf[:, s_off:s_off + l_len] = y
    o_ref[...] = buf[:, s_off:s_off + l_len]


# ---------------------------------------------------------------------------
# pallas_call wrappers
# ---------------------------------------------------------------------------
def _tiled(rows, tm):
    return pl.BlockSpec((rows, tm), lambda i: (0, i))


def _resident(shape):
    nd = len(shape)
    return pl.BlockSpec(shape, lambda i, _nd=nd: (0,) * _nd)


def conv_bn_relu_T(pT, w_scaled, shift):
    """pT:(K,M) bf16, w:(C,K) bf16 (BN scale folded), shift:(C,1) f32 -> (C,M) f32."""
    k, m = pT.shape
    c_out = w_scaled.shape[0]
    tm = _choose_tile_m(m)
    return pl.pallas_call(
        _conv_bn_relu_kernel,
        out_shape=jax.ShapeDtypeStruct((c_out, m), jnp.float32),
        grid=(pl.cdiv(m, tm),),
        in_specs=[_tiled(k, tm), _resident((c_out, k)), _resident((c_out, 1))],
        out_specs=_tiled(c_out, tm),
        compiler_params=_PARALLEL,
    )(pT, w_scaled, shift)


def conv_T(pT, w):
    """pT:(K,M) bf16, w:(C,K) bf16 -> (C,M) f32 (no affine, no activation)."""
    k, m = pT.shape
    c_out = w.shape[0]
    tm = _choose_tile_m(m)
    return pl.pallas_call(
        _conv_kernel,
        out_shape=jax.ShapeDtypeStruct((c_out, m), jnp.float32),
        grid=(pl.cdiv(m, tm),),
        in_specs=[_tiled(k, tm), _resident((c_out, k))],
        out_specs=_tiled(c_out, tm),
        compiler_params=_PARALLEL,
    )(pT, w)


def res_stack_T(xp, mask, w3_all, b1_all, w1_all, b2_all, wp):
    """Fused residual-block stack on the padded-flat activation.

    xp:(C, L=N*Hp*Wp) f32 zero-padded activation, mask:(1,L) f32 interior mask,
    w3_all:(R*9, C, C) bf16, w1_all:(R, C, C) bf16, b1_all/b2_all:(R, C, 1) f32.
    Returns (C, L) f32 in the same padded-flat layout (pads zero).
    """
    c, l_len = xp.shape
    n_blocks = b1_all.shape[0]
    s_off = wp + 1
    kernel = functools.partial(_res_stack_kernel, n_blocks=n_blocks, s_off=s_off,
                               wp=wp, l_len=l_len, n_ch=c)
    return pl.pallas_call(
        kernel,
        out_shape=jax.ShapeDtypeStruct((c, l_len), jnp.float32),
        grid=(1,),
        in_specs=[
            _resident((c, l_len)),        # padded activation (residual input)
            _resident((1, l_len)),        # interior mask
            _resident(w3_all.shape),      # 3x3 taps, BN1 scale folded
            _resident(b1_all.shape),      # BN1 shift
            _resident(w1_all.shape),      # 1x1 weights, BN2 scale folded
            _resident(b2_all.shape),      # BN2 shift
        ],
        out_specs=_resident((c, l_len)),
        scratch_shapes=[pltpu.VMEM((c, l_len + 2 * s_off), jnp.float32)],
        compiler_params=_ARBITRARY,
    )(xp, mask, w3_all, b1_all, w1_all, b2_all)


# ---------------------------------------------------------------------------
# Host-side glue: transposed im2col, BN folding, parameter packing / init
# ---------------------------------------------------------------------------
def im2col_T(x, k, stride, pad):
    """x: (N, C, H, W) -> transposed patch matrix (C*k*k, N*Ho*Wo)."""
    n, c, h, w = x.shape
    xp = jnp.pad(x, ((0, 0), (0, 0), (pad, pad), (pad, pad)))
    ho = (h + 2 * pad - k) // stride + 1
    wo = (w + 2 * pad - k) // stride + 1
    cols = []
    for i in range(k):
        for j in range(k):
            cols.append(xp[:, :, i:i + stride * ho:stride, j:j + stride * wo:stride])
    p = jnp.stack(cols, axis=2)                              # (N, C, k*k, Ho, Wo)
    pT = p.transpose(1, 2, 0, 3, 4).reshape(c * k * k, n * ho * wo)
    return pT, ho, wo


def bn_fold(gamma, beta, mean, var, eps=1e-5):
    scale = gamma / jnp.sqrt(var + eps)
    shift = beta - mean * scale
    return scale, shift


def _stack_res_params(res_blocks):
    """Fold BN scales and stack per-block weights for the fused residual kernel."""
    w3_list, b1_list, w1_list, b2_list = [], [], [], []
    for rb in res_blocks:
        c = rb["w1x1"].shape[0]
        s1, b1 = bn_fold(*rb["bn1"])
        s2, b2 = bn_fold(*rb["bn2"])
        w3 = (rb["w3x3"] * s1[:, None]).reshape(c, c, 3, 3)   # (Cout, Cin, kh, kw)
        taps = [w3[:, :, kh, kw] for kh in range(3) for kw in range(3)]
        w3_list.append(jnp.stack(taps, axis=0))               # (9, C, C), t = kh*3+kw
        w1_list.append(rb["w1x1"] * s2[:, None])               # (C, C)
        b1_list.append(b1[:, None])
        b2_list.append(b2[:, None])
    w3_all = jnp.concatenate(w3_list, axis=0).astype(jnp.bfloat16)   # (R*9, C, C)
    w1_all = jnp.stack(w1_list, axis=0).astype(jnp.bfloat16)         # (R, C, C)
    b1_all = jnp.stack(b1_list, axis=0)                              # (R, C, 1) f32
    b2_all = jnp.stack(b2_list, axis=0)                              # (R, C, 1) f32
    return w3_all, b1_all, w1_all, b2_all


def init_bn(key, c):
    k1, k2, k3, k4 = jax.random.split(key, 4)
    gamma = 1.0 + 0.1 * jax.random.normal(k1, (c,), jnp.float32)
    beta = 0.1 * jax.random.normal(k2, (c,), jnp.float32)
    mean = 0.1 * jax.random.normal(k3, (c,), jnp.float32)
    var = 0.5 + jax.random.uniform(k4, (c,), jnp.float32)
    return (gamma, beta, mean, var)


def init_params(key, latent_ndim, n_resblocks):
    c1 = latent_ndim // 2
    c2 = latent_ndim
    keys = jax.random.split(key, 3 + 4 * n_resblocks)
    params = {
        # conv1: Conv2d(1, c1, 4, 2, 1, bias=False) -> weight (c1, 1*4*4)
        "w1": 0.1 * jax.random.normal(keys[0], (c1, 1 * 4 * 4), jnp.float32),
        "bn1": init_bn(keys[1], c1),
        # conv2: Conv2d(c1, c2, 4, 2, 1, bias=False) -> (c2, c1*4*4)
        "w2": 0.1 * jax.random.normal(keys[2], (c2, c1 * 4 * 4), jnp.float32),
        "res_blocks": [],
    }
    for r in range(n_resblocks):
        kk = keys[3 + 4 * r: 3 + 4 * (r + 1)]
        params["res_blocks"].append({
            "w3x3": 0.1 * jax.random.normal(kk[0], (c2, c2 * 3 * 3), jnp.float32),
            "bn1": init_bn(kk[1], c2),
            "w1x1": 0.1 * jax.random.normal(kk[2], (c2, c2), jnp.float32),
            "bn2": init_bn(kk[3], c2),
        })
    return params


# ---------------------------------------------------------------------------
# Forward pass
# ---------------------------------------------------------------------------
def encoder_forward(x, params):
    """x: (N, 1, H, W) float32 NCHW. Returns (N, latent_ndim, H//4, W//4) f32."""
    n = x.shape[0]
    # conv1 = Conv2d(1, c1, 4, 2, 1) + BatchNorm2d + ReLU (BN scale folded into W)
    s, b = bn_fold(*params["bn1"])
    w1 = (params["w1"] * s[:, None]).astype(jnp.bfloat16)
    pT, ho, wo = im2col_T(x, 4, 2, 1)
    yT = conv_bn_relu_T(pT.astype(jnp.bfloat16), w1, b[:, None])
    c1 = w1.shape[0]
    h = yT.reshape(c1, n, ho, wo).transpose(1, 0, 2, 3)

    # conv2 = Conv2d(c1, c2, 4, 2, 1), no BN / activation
    pT, ho, wo = im2col_T(h, 4, 2, 1)
    w2 = params["w2"].astype(jnp.bfloat16)
    yT = conv_T(pT.astype(jnp.bfloat16), w2)                  # (c2, n*ho*wo)
    c2 = w2.shape[0]
    if not params["res_blocks"]:
        return yT.reshape(c2, n, ho, wo).transpose(1, 0, 2, 3)

    # Fused residual-block stack in padded-flat layout (one pallas_call for all blocks)
    hr, wr = ho, wo
    hp, wp = hr + 2, wr + 2
    xp = yT.reshape(c2, n, hr, wr)
    xp = jnp.pad(xp, ((0, 0), (0, 0), (1, 1), (1, 1)))        # zero spatial pad
    xp = xp.reshape(c2, n * hp * wp)
    ip = jnp.arange(hp)
    jp = jnp.arange(wp)
    m2d = (((ip >= 1) & (ip <= hr))[:, None] & ((jp >= 1) & (jp <= wr))[None, :])
    mask = jnp.broadcast_to(m2d, (n, hp, wp)).reshape(1, -1).astype(jnp.float32)

    w3_all, b1_all, w1_all, b2_all = _stack_res_params(params["res_blocks"])
    yp = res_stack_T(xp, mask, w3_all, b1_all, w1_all, b2_all, wp)
    out = yp.reshape(c2, n, hp, wp)[:, :, 1:1 + hr, 1:1 + wr].transpose(1, 0, 2, 3)
    return out


# ---------------------------------------------------------------------------
# Pure-JAX f32 reference (mirrors the PyTorch module, eval-mode BN)
# ---------------------------------------------------------------------------
def _conv2d_ref(x, w_flat, k, stride, pad):
    c_out = w_flat.shape[0]
    c_in = w_flat.shape[1] // (k * k)
    w = w_flat.reshape(c_out, c_in, k, k)
    return lax.conv_general_dilated(
        x, w, window_strides=(stride, stride),
        padding=[(pad, pad), (pad, pad)],
        dimension_numbers=("NCHW", "OIHW", "NCHW"))


def _bn_ref(x, bn, eps=1e-5):
    gamma, beta, mean, var = bn
    s = gamma / jnp.sqrt(var + eps)
    return x * s[None, :, None, None] + (beta - mean * s)[None, :, None, None]


def encoder_reference(x, params):
    h = _conv2d_ref(x, params["w1"], 4, 2, 1)
    h = jnp.maximum(_bn_ref(h, params["bn1"]), 0.0)
    h = _conv2d_ref(h, params["w2"], 4, 2, 1)
    for rb in params["res_blocks"]:
        t = jnp.maximum(h, 0.0)
        t = _conv2d_ref(t, rb["w3x3"], 3, 1, 1)
        t = jnp.maximum(_bn_ref(t, rb["bn1"]), 0.0)
        t = _conv2d_ref(t, rb["w1x1"], 1, 1, 0)
        t = _bn_ref(t, rb["bn2"])
        h = h + t
    return h


if __name__ == "__main__":
    latent_ndim = 32
    n_resblocks = 2
    batch, height, width = 2, 16, 16

    key = jax.random.PRNGKey(0)
    k_params, k_x = jax.random.split(key)
    params = init_params(k_params, latent_ndim, n_resblocks)
    x = jax.random.normal(k_x, (batch, 1, height, width), jnp.float32)

    fwd = jax.jit(encoder_forward)
    out = jax.block_until_ready(fwd(x, params))
    assert out.shape == (batch, latent_ndim, height // 4, width // 4), out.shape
    assert out.dtype == jnp.float32

    ref = jax.block_until_ready(encoder_reference(x, params))
    err = float(jnp.max(jnp.abs(out - ref)))
    assert err < 5e-2, f"max abs error vs reference: {err}"
    print("KERNEL_OK")
</pallas_src>

<mosaic_0001>
module attributes {stable_mosaic.version = 11 : i64} {
  func.func @_conv_bn_relu_kernel(%arg0: i32, %arg1: memref<16x128xbf16, #tpu.memory_space<vmem>>, %arg2: memref<16x16xbf16, #tpu.memory_space<vmem>>, %arg3: memref<16x1xf32, #tpu.memory_space<vmem>>, %arg4: memref<16x128xf32, #tpu.memory_space<vmem>>) attributes {dimension_semantics = [#tpu.dimension_semantics<parallel>], iteration_bounds = array<i64: 1>, scalar_prefetch = 0 : i64, scratch_operands = 0 : i64, tpu.core_type = #tpu.core_type<tc>, window_params = [{transform_indices = @transform_0, window_bounds = array<i64: 16, 128>}, {pipeline_mode = #tpu.pipeline_mode<synchronous>, transform_indices = @transform_1, window_bounds = array<i64: 16, 16>}, {pipeline_mode = #tpu.pipeline_mode<synchronous>, transform_indices = @transform_2, window_bounds = array<i64: 16, 1>}, {transform_indices = @transform_3, window_bounds = array<i64: 16, 128>}]} {
    %c0 = arith.constant 0 : index
    %c0_0 = arith.constant 0 : index
    %0 = vector.load %arg2[%c0, %c0_0] : memref<16x16xbf16, #tpu.memory_space<vmem>>, vector<16x16xbf16>
    %c0_1 = arith.constant 0 : index
    %c0_2 = arith.constant 0 : index
    %1 = vector.load %arg1[%c0_1, %c0_2] : memref<16x128xbf16, #tpu.memory_space<vmem>>, vector<16x128xbf16>
    %cst = arith.constant dense<0.000000e+00> : vector<16x128xf32>
    %2 = tpu.matmul %0, %1, %cst {dimension_numbers = #tpu.dot_dimension_numbers<[1], [0], [0], [1], [0, 0, 1, 1], [], []>} : vector<16x16xbf16>, vector<16x128xbf16>, vector<16x128xf32> -> vector<16x128xf32>
    %c0_3 = arith.constant 0 : index
    %c0_4 = arith.constant 0 : index
    %3 = vector.load %arg3[%c0_3, %c0_4] : memref<16x1xf32, #tpu.memory_space<vmem>>, vector<16x1xf32>
    %4 = vector.broadcast %3 : vector<16x1xf32> to vector<16x128xf32>
    %5 = arith.addf %2, %4 : vector<16x128xf32>
    %cst_5 = arith.constant 0.000000e+00 : f32
    %6 = vector.broadcast %cst_5 : f32 to vector<16x128xf32>
    %7 = arith.maximumf %5, %6 : vector<16x128xf32>
    %c0_6 = arith.constant 0 : index
    %c0_7 = arith.constant 0 : index
    %8 = vector.load %arg4[%c0_6, %c0_7] : memref<16x128xf32, #tpu.memory_space<vmem>>, vector<16x128xf32>
    tpu.vector_store %arg4[%c0_6, %c0_7], %7 {strides = array<i32>} : memref<16x128xf32, #tpu.memory_space<vmem>>, vector<16x128xf32>,
    return
  }
  func.func @transform_0(%arg0: i32) -> (i32, i32) {
    %c0_i32 = arith.constant 0 : i32
    %c0_i32_0 = arith.constant 0 : i32
    return %c0_i32, %arg0 : i32, i32
  }
  func.func @transform_1(%arg0: i32) -> (i32, i32) {
    %c0_i32 = arith.constant 0 : i32
    %c0_i32_0 = arith.constant 0 : i32
    %c0_i32_1 = arith.constant 0 : i32
    return %c0_i32, %c0_i32_0 : i32, i32
  }
  func.func @transform_2(%arg0: i32) -> (i32, i32) {
    %c0_i32 = arith.constant 0 : i32
    %c0_i32_0 = arith.constant 0 : i32
    %c0_i32_1 = arith.constant 0 : i32
    return %c0_i32, %c0_i32_0 : i32, i32
  }
  func.func @transform_3(%arg0: i32) -> (i32, i32) {
    %c0_i32 = arith.constant 0 : i32
    %c0_i32_0 = arith.constant 0 : i32
    return %c0_i32, %arg0 : i32, i32
  }
}

module attributes {stable_mosaic.version = 11 : i64} {
  func.func @_conv_kernel(%arg0: i32, %arg1: memref<256x32xbf16, #tpu.memory_space<vmem>>, %arg2: memref<32x256xbf16, #tpu.memory_space<vmem>>, %arg3: memref<32x32xf32, #tpu.memory_space<vmem>>) attributes {dimension_semantics = [#tpu.dimension_semantics<parallel>], iteration_bounds = array<i64: 1>, scalar_prefetch = 0 : i64, scratch_operands = 0 : i64, tpu.core_type = #tpu.core_type<tc>, window_params = [{transform_indices = @transform_0, window_bounds = array<i64: 256, 32>}, {pipeline_mode = #tpu.pipeline_mode<synchronous>, transform_indices = @transform_1, window_bounds = array<i64: 32, 256>}, {transform_indices = @transform_2, window_bounds = array<i64: 32, 32>}]} {
    %c0 = arith.constant 0 : index
    %c0_0 = arith.constant 0 : index
    %0 = vector.load %arg2[%c0, %c0_0] : memref<32x256xbf16, #tpu.memory_space<vmem>>, vector<32x256xbf16>
    %c0_1 = arith.constant 0 : index
    %c0_2 = arith.constant 0 : index
    %1 = vector.load %arg1[%c0_1, %c0_2] : memref<256x32xbf16, #tpu.memory_space<vmem>>, vector<256x32xbf16>
    %cst = arith.constant dense<0.000000e+00> : vector<32x32xf32>
    %2 = tpu.matmul %0, %1, %cst {dimension_numbers = #tpu.dot_dimension_numbers<[1], [0], [0], [1], [0, 0, 1, 1], [], []>} : vector<32x256xbf16>, vector<256x32xbf16>, vector<32x32xf32> -> vector<32x32xf32>
    %c0_3 = arith.constant 0 : index
    %c0_4 = arith.constant 0 : index
    %3 = vector.load %arg3[%c0_3, %c0_4] : memref<32x32xf32, #tpu.memory_space<vmem>>, vector<32x32xf32>
    tpu.vector_store %arg3[%c0_3, %c0_4], %2 {strides = array<i32>} : memref<32x32xf32, #tpu.memory_space<vmem>>, vector<32x32xf32>,
    return
  }
  func.func @transform_0(%arg0: i32) -> (i32, i32) {
    %c0_i32 = arith.constant 0 : i32
    %c0_i32_0 = arith.constant 0 : i32
    return %c0_i32, %arg0 : i32, i32
  }
  func.func @transform_1(%arg0: i32) -> (i32, i32) {
    %c0_i32 = arith.constant 0 : i32
    %c0_i32_0 = arith.constant 0 : i32
    %c0_i32_1 = arith.constant 0 : i32
    return %c0_i32, %c0_i32_0 : i32, i32
  }
  func.func @transform_2(%arg0: i32) -> (i32, i32) {
    %c0_i32 = arith.constant 0 : i32
    %c0_i32_0 = arith.constant 0 : i32
    return %c0_i32, %arg0 : i32, i32
  }
}

module attributes {stable_mosaic.version = 11 : i64} {
  func.func @_res_stack_kernel(%arg0: i32, %arg1: memref<32x72xf32, #tpu.memory_space<vmem>>, %arg2: memref<1x72xf32, #tpu.memory_space<vmem>>, %arg3: memref<18x32x32xbf16, #tpu.memory_space<vmem>>, %arg4: memref<2x32x1xf32, #tpu.memory_space<vmem>>, %arg5: memref<2x32x32xbf16, #tpu.memory_space<vmem>>, %arg6: memref<2x32x1xf32, #tpu.memory_space<vmem>>, %arg7: memref<32x72xf32, #tpu.memory_space<vmem>>, %arg8: memref<32x86xf32, #tpu.memory_space<vmem>>) attributes {dimension_semantics = [#tpu.dimension_semantics<arbitrary>], iteration_bounds = array<i64: 1>, scalar_prefetch = 0 : i64, scratch_operands = 1 : i64, tpu.core_type = #tpu.core_type<tc>, window_params = [{pipeline_mode = #tpu.pipeline_mode<synchronous>, transform_indices = @transform_0, window_bounds = array<i64: 32, 72>}, {pipeline_mode = #tpu.pipeline_mode<synchronous>, transform_indices = @transform_1, window_bounds = array<i64: 1, 72>}, {pipeline_mode = #tpu.pipeline_mode<synchronous>, transform_indices = @transform_2, window_bounds = array<i64: 18, 32, 32>}, {pipeline_mode = #tpu.pipeline_mode<synchronous>, transform_indices = @transform_3, window_bounds = array<i64: 2, 32, 1>}, {pipeline_mode = #tpu.pipeline_mode<synchronous>, transform_indices = @transform_4, window_bounds = array<i64: 2, 32, 32>}, {pipeline_mode = #tpu.pipeline_mode<synchronous>, transform_indices = @transform_5, window_bounds = array<i64: 2, 32, 1>}, {pipeline_mode = #tpu.pipeline_mode<synchronous>, transform_indices = @transform_6, window_bounds = array<i64: 32, 72>}]} {
    %cst = arith.constant 0.000000e+00 : f32
    %0 = vector.broadcast %cst : f32 to vector<32x86xf32>
    %c0 = arith.constant 0 : index
    %c0_0 = arith.constant 0 : index
    %1 = vector.load %arg8[%c0, %c0_0] : memref<32x86xf32, #tpu.memory_space<vmem>>, vector<32x86xf32>
    tpu.vector_store %arg8[%c0, %c0_0], %0 {strides = array<i32>} : memref<32x86xf32, #tpu.memory_space<vmem>>, vector<32x86xf32>,
    %c0_1 = arith.constant 0 : index
    %c0_2 = arith.constant 0 : index
    %2 = vector.load %arg1[%c0_1, %c0_2] : memref<32x72xf32, #tpu.memory_space<vmem>>, vector<32x72xf32>
    %c0_3 = arith.constant 0 : index
    %c7 = arith.constant 7 : index
    %3 = vector.load %arg8[%c0_3, %c7] : memref<32x86xf32, #tpu.memory_space<vmem>>, vector<32x72xf32>
    tpu.vector_store %arg8[%c0_3, %c7], %2 {strides = array<i32>} : memref<32x86xf32, #tpu.memory_space<vmem>>, vector<32x72xf32>,
    %c0_4 = arith.constant 0 : index
    %c0_5 = arith.constant 0 : index
    %4 = vector.load %arg2[%c0_4, %c0_5] : memref<1x72xf32, #tpu.memory_space<vmem>>, vector<1x72xf32>
    %c0_6 = arith.constant 0 : index
    %c0_7 = arith.constant 0 : index
    %5 = vector.load %arg8[%c0_6, %c0_7] : memref<32x86xf32, #tpu.memory_space<vmem>>, vector<32x86xf32>
    %cst_8 = arith.constant 0.000000e+00 : f32
    %6 = vector.broadcast %cst_8 : f32 to vector<32x86xf32>
    %7 = arith.maximumf %5, %6 : vector<32x86xf32>
    %8 = arith.truncf %7 : vector<32x86xf32> to vector<32x86xbf16>
    %cst_9 = arith.constant 0.000000e+00 : f32
    %9 = vector.broadcast %cst_9 : f32 to vector<32x72xf32>
    %c0_10 = arith.constant 0 : index
    %c0_11 = arith.constant 0 : index
    %c0_12 = arith.constant 0 : index
    %10 = vector.load %arg3[%c0_10, %c0_11, %c0_12] : memref<18x32x32xbf16, #tpu.memory_space<vmem>>, vector<1x32x32xbf16>
    %11 = vector.shape_cast %10 : vector<1x32x32xbf16> to vector<32x32xbf16>
    %12 = vector.extract_strided_slice %8 {offsets = [0, 0], sizes = [32, 72], strides = [1, 1]} : vector<32x86xbf16> to vector<32x72xbf16>
    %cst_13 = arith.constant dense<0.000000e+00> : vector<32x72xf32>
    %13 = tpu.matmul %11, %12, %cst_13 {dimension_numbers = #tpu.dot_dimension_numbers<[1], [0], [0], [1], [0, 0, 1, 1], [], []>} : vector<32x32xbf16>, vector<32x72xbf16>, vector<32x72xf32> -> vector<32x72xf32>
    %14 = arith.addf %9, %13 : vector<32x72xf32>
    %c1 = arith.constant 1 : index
    %c0_14 = arith.constant 0 : index
    %c0_15 = arith.constant 0 : index
    %15 = vector.load %arg3[%c1, %c0_14, %c0_15] : memref<18x32x32xbf16, #tpu.memory_space<vmem>>, vector<1x32x32xbf16>
    %16 = vector.shape_cast %15 : vector<1x32x32xbf16> to vector<32x32xbf16>
    %17 = vector.extract_strided_slice %8 {offsets = [0, 1], sizes = [32, 72], strides = [1, 1]} : vector<32x86xbf16> to vector<32x72xbf16>
    %cst_16 = arith.constant dense<0.000000e+00> : vector<32x72xf32>
    %18 = tpu.matmul %16, %17, %cst_16 {dimension_numbers = #tpu.dot_dimension_numbers<[1], [0], [0], [1], [0, 0, 1, 1], [], []>} : vector<32x32xbf16>, vector<32x72xbf16>, vector<32x72xf32> -> vector<32x72xf32>
    %19 = arith.addf %14, %18 : vector<32x72xf32>
    %c2 = arith.constant 2 : index
    %c0_17 = arith.constant 0 : index
    %c0_18 = arith.constant 0 : index
    %20 = vector.load %arg3[%c2, %c0_17, %c0_18] : memref<18x32x32xbf16, #tpu.memory_space<vmem>>, vector<1x32x32xbf16>
    %21 = vector.shape_cast %20 : vector<1x32x32xbf16> to vector<32x32xbf16>
    %22 = vector.extract_strided_slice %8 {offsets = [0, 2], sizes = [32, 72], strides = [1, 1]} : vector<32x86xbf16> to vector<32x72xbf16>
    %cst_19 = arith.constant dense<0.000000e+00> : vector<32x72xf32>
    %23 = tpu.matmul %21, %22, %cst_19 {dimension_numbers = #tpu.dot_dimension_numbers<[1], [0], [0], [1], [0, 0, 1, 1], [], []>} : vector<32x32xbf16>, vector<32x72xbf16>, vector<32x72xf32> -> vector<32x72xf32>
    %24 = arith.addf %19, %23 : vector<32x72xf32>
    %c3 = arith.constant 3 : index
    %c0_20 = arith.constant 0 : index
    %c0_21 = arith.constant 0 : index
    %25 = vector.load %arg3[%c3, %c0_20, %c0_21] : memref<18x32x32xbf16, #tpu.memory_space<vmem>>, vector<1x32x32xbf16>
    %26 = vector.shape_cast %25 : vector<1x32x32xbf16> to vector<32x32xbf16>
    %27 = vector.extract_strided_slice %8 {offsets = [0, 6], sizes = [32, 72], strides = [1, 1]} : vector<32x86xbf16> to vector<32x72xbf16>
    %cst_22 = arith.constant dense<0.000000e+00> : vector<32x72xf32>
    %28 = tpu.matmul %26, %27, %cst_22 {dimension_numbers = #tpu.dot_dimension_numbers<[1], [0], [0], [1], [0, 0, 1, 1], [], []>} : vector<32x32xbf16>, vector<32x72xbf16>, vector<32x72xf32> -> vector<32x72xf32>
    %29 = arith.addf %24, %28 : vector<32x72xf32>
    %c4 = arith.constant 4 : index
    %c0_23 = arith.constant 0 : index
    %c0_24 = arith.constant 0 : index
    %30 = vector.load %arg3[%c4, %c0_23, %c0_24] : memref<18x32x32xbf16, #tpu.memory_space<vmem>>, vector<1x32x32xbf16>
    %31 = vector.shape_cast %30 : vector<1x32x32xbf16> to vector<32x32xbf16>
    %32 = vector.extract_strided_slice %8 {offsets = [0, 7], sizes = [32, 72], strides = [1, 1]} : vector<32x86xbf16> to vector<32x72xbf16>
    %cst_25 = arith.constant dense<0.000000e+00> : vector<32x72xf32>
    %33 = tpu.matmul %31, %32, %cst_25 {dimension_numbers = #tpu.dot_dimension_numbers<[1], [0], [0], [1], [0, 0, 1, 1], [], []>} : vector<32x32xbf16>, vector<32x72xbf16>, vector<32x72xf32> -> vector<32x72xf32>
    %34 = arith.addf %29, %33 : vector<32x72xf32>
    %c5 = arith.constant 5 : index
    %c0_26 = arith.constant 0 : index
    %c0_27 = arith.constant 0 : index
    %35 = vector.load %arg3[%c5, %c0_26, %c0_27] : memref<18x32x32xbf16, #tpu.memory_space<vmem>>, vector<1x32x32xbf16>
    %36 = vector.shape_cast %35 : vector<1x32x32xbf16> to vector<32x32xbf16>
    %37 = vector.extract_strided_slice %8 {offsets = [0, 8], sizes = [32, 72], strides = [1, 1]} : vector<32x86xbf16> to vector<32x72xbf16>
    %cst_28 = arith.constant dense<0.000000e+00> : vector<32x72xf32>
    %38 = tpu.matmul %36, %37, %cst_28 {dimension_numbers = #tpu.dot_dimension_numbers<[1], [0], [0], [1], [0, 0, 1, 1], [], []>} : vector<32x32xbf16>, vector<32x72xbf16>, vector<32x72xf32> -> vector<32x72xf32>
    %39 = arith.addf %34, %38 : vector<32x72xf32>
    %c6 = arith.constant 6 : index
    %c0_29 = arith.constant 0 : index
    %c0_30 = arith.constant 0 : index
    %40 = vector.load %arg3[%c6, %c0_29, %c0_30] : memref<18x32x32xbf16, #tpu.memory_space<vmem>>, vector<1x32x32xbf16>
    %41 = vector.shape_cast %40 : vector<1x32x32xbf16> to vector<32x32xbf16>
    %42 = vector.extract_strided_slice %8 {offsets = [0, 12], sizes = [32, 72], strides = [1, 1]} : vector<32x86xbf16> to vector<32x72xbf16>
    %cst_31 = arith.constant dense<0.000000e+00> : vector<32x72xf32>
    %43 = tpu.matmul %41, %42, %cst_31 {dimension_numbers = #tpu.dot_dimension_numbers<[1], [0], [0], [1], [0, 0, 1, 1], [], []>} : vector<32x32xbf16>, vector<32x72xbf16>, vector<32x72xf32> -> vector<32x72xf32>
    %44 = arith.addf %39, %43 : vector<32x72xf32>
    %c7_32 = arith.constant 7 : index
    %c0_33 = arith.constant 0 : index
    %c0_34 = arith.constant 0 : index
    %45 = vector.load %arg3[%c7_32, %c0_33, %c0_34] : memref<18x32x32xbf16, #tpu.memory_space<vmem>>, vector<1x32x32xbf16>
    %46 = vector.shape_cast %45 : vector<1x32x32xbf16> to vector<32x32xbf16>
    %47 = vector.extract_strided_slice %8 {offsets = [0, 13], sizes = [32, 72], strides = [1, 1]} : vector<32x86xbf16> to vector<32x72xbf16>
    %cst_35 = arith.constant dense<0.000000e+00> : vector<32x72xf32>
    %48 = tpu.matmul %46, %47, %cst_35 {dimension_numbers = #tpu.dot_dimension_numbers<[1], [0], [0], [1], [0, 0, 1, 1], [], []>} : vector<32x32xbf16>, vector<32x72xbf16>, vector<32x72xf32> -> vector<32x72xf32>
    %49 = arith.addf %44, %48 : vector<32x72xf32>
    %c8 = arith.constant 8 : index
    %c0_36 = arith.constant 0 : index
    %c0_37 = arith.constant 0 : index
    %50 = vector.load %arg3[%c8, %c0_36, %c0_37] : memref<18x32x32xbf16, #tpu.memory_space<vmem>>, vector<1x32x32xbf16>
    %51 = vector.shape_cast %50 : vector<1x32x32xbf16> to vector<32x32xbf16>
    %52 = vector.extract_strided_slice %8 {offsets = [0, 14], sizes = [32, 72], strides = [1, 1]} : vector<32x86xbf16> to vector<32x72xbf16>
    %cst_38 = arith.constant dense<0.000000e+00> : vector<32x72xf32>
    %53 = tpu.matmul %51, %52, %cst_38 {dimension_numbers = #tpu.dot_dimension_numbers<[1], [0], [0], [1], [0, 0, 1, 1], [], []>} : vector<32x32xbf16>, vector<32x72xbf16>, vector<32x72xf32> -> vector<32x72xf32>
    %54 = arith.addf %49, %53 : vector<32x72xf32>
    %c0_39 = arith.constant 0 : index
    %c0_40 = arith.constant 0 : index
    %c0_41 = arith.constant 0 : index
    %55 = vector.load %arg4[%c0_39, %c0_40, %c0_41] : memref<2x32x1xf32, #tpu.memory_space<vmem>>, vector<1x32x1xf32>
    %56 = vector.shape_cast %55 : vector<1x32x1xf32> to vector<32x1xf32>
    %57 = vector.broadcast %56 : vector<32x1xf32> to vector<32x72xf32>
    %58 = arith.addf %54, %57 : vector<32x72xf32>
    %cst_42 = arith.constant 0.000000e+00 : f32
    %59 = vector.broadcast %cst_42 : f32 to vector<32x72xf32>
    %60 = arith.maximumf %58, %59 : vector<32x72xf32>
    %61 = arith.truncf %60 : vector<32x72xf32> to vector<32x72xbf16>
    %c0_43 = arith.constant 0 : index
    %c0_44 = arith.constant 0 : index
    %c0_45 = arith.constant 0 : index
    %62 = vector.load %arg5[%c0_43, %c0_44, %c0_45] : memref<2x32x32xbf16, #tpu.memory_space<vmem>>, vector<1x32x32xbf16>
    %63 = vector.shape_cast %62 : vector<1x32x32xbf16> to vector<32x32xbf16>
    %cst_46 = arith.constant dense<0.000000e+00> : vector<32x72xf32>
    %64 = tpu.matmul %63, %61, %cst_46 {dimension_numbers = #tpu.dot_dimension_numbers<[1], [0], [0], [1], [0, 0, 1, 1], [], []>} : vector<32x32xbf16>, vector<32x72xbf16>, vector<32x72xf32> -> vector<32x72xf32>
    %c0_47 = arith.constant 0 : index
    %c0_48 = arith.constant 0 : index
    %c0_49 = arith.constant 0 : index
    %65 = vector.load %arg6[%c0_47, %c0_48, %c0_49] : memref<2x32x1xf32, #tpu.memory_space<vmem>>, vector<1x32x1xf32>
    %66 = vector.shape_cast %65 : vector<1x32x1xf32> to vector<32x1xf32>
    %67 = vector.broadcast %66 : vector<32x1xf32> to vector<32x72xf32>
    %68 = arith.addf %64, %67 : vector<32x72xf32>
    %c0_50 = arith.constant 0 : index
    %c7_51 = arith.constant 7 : index
    %69 = vector.load %arg8[%c0_50, %c7_51] : memref<32x86xf32, #tpu.memory_space<vmem>>, vector<32x72xf32>
    %70 = arith.addf %68, %69 : vector<32x72xf32>
    %71 = vector.broadcast %4 : vector<1x72xf32> to vector<32x72xf32>
    %72 = arith.mulf %70, %71 : vector<32x72xf32>
    %c0_52 = arith.constant 0 : index
    %c7_53 = arith.constant 7 : index
    %73 = vector.load %arg8[%c0_52, %c7_53] : memref<32x86xf32, #tpu.memory_space<vmem>>, vector<32x72xf32>
    tpu.vector_store %arg8[%c0_52, %c7_53], %72 {strides = array<i32>} : memref<32x86xf32, #tpu.memory_space<vmem>>, vector<32x72xf32>,
    %c0_54 = arith.constant 0 : index
    %c0_55 = arith.constant 0 : index
    %74 = vector.load %arg8[%c0_54, %c0_55] : memref<32x86xf32, #tpu.memory_space<vmem>>, vector<32x86xf32>
    %cst_56 = arith.constant 0.000000e+00 : f32
    %75 = vector.broadcast %cst_56 : f32 to vector<32x86xf32>
    %76 = arith.maximumf %74, %75 : vector<32x86xf32>
    %77 = arith.truncf %76 : vector<32x86xf32> to vector<32x86xbf16>
    %cst_57 = arith.constant 0.000000e+00 : f32
    %78 = vector.broadcast %cst_57 : f32 to vector<32x72xf32>
    %c9 = arith.constant 9 : index
    %c0_58 = arith.constant 0 : index
    %c0_59 = arith.constant 0 : index
    %79 = vector.load %arg3[%c9, %c0_58, %c0_59] : memref<18x32x32xbf16, #tpu.memory_space<vmem>>, vector<1x32x32xbf16>
    %80 = vector.shape_cast %79 : vector<1x32x32xbf16> to vector<32x32xbf16>
    %81 = vector.extract_strided_slice %77 {offsets = [0, 0], sizes = [32, 72], strides = [1, 1]} : vector<32x86xbf16> to vector<32x72xbf16>
    %cst_60 = arith.constant dense<0.000000e+00> : vector<32x72xf32>
    %82 = tpu.matmul %80, %81, %cst_60 {dimension_numbers = #tpu.dot_dimension_numbers<[1], [0], [0], [1], [0, 0, 1, 1], [], []>} : vector<32x32xbf16>, vector<32x72xbf16>, vector<32x72xf32> -> vector<32x72xf32>
    %83 = arith.addf %78, %82 : vector<32x72xf32>
    %c10 = arith.constant 10 : index
    %c0_61 = arith.constant 0 : index
    %c0_62 = arith.constant 0 : index
    %84 = vector.load %arg3[%c10, %c0_61, %c0_62] : memref<18x32x32xbf16, #tpu.memory_space<vmem>>, vector<1x32x32xbf16>
    %85 = vector.shape_cast %84 : vector<1x32x32xbf16> to vector<32x32xbf16>
    %86 = vector.extract_strided_slice %77 {offsets = [0, 1], sizes = [32, 72], strides = [1, 1]} : vector<32x86xbf16> to vector<32x72xbf16>
    %cst_63 = arith.constant dense<0.000000e+00> : vector<32x72xf32>
    %87 = tpu.matmul %85, %86, %cst_63 {dimension_numbers = #tpu.dot_dimension_numbers<[1], [0], [0], [1], [0, 0, 1, 1], [], []>} : vector<32x32xbf16>, vector<32x72xbf16>, vector<32x72xf32> -> vector<32x72xf32>
    %88 = arith.addf %83, %87 : vector<32x72xf32>
    %c11 = arith.constant 11 : index
    %c0_64 = arith.constant 0 : index
    %c0_65 = arith.constant 0 : index
    %89 = vector.load %arg3[%c11, %c0_64, %c0_65] : memref<18x32x32xbf16, #tpu.memory_space<vmem>>, vector<1x32x32xbf16>
    %90 = vector.shape_cast %89 : vector<1x32x32xbf16> to vector<32x32xbf16>
    %91 = vector.extract_strided_slice %77 {offsets = [0, 2], sizes = [32, 72], strides = [1, 1]} : vector<32x86xbf16> to vector<32x72xbf16>
    %cst_66 = arith.constant dense<0.000000e+00> : vector<32x72xf32>
    %92 = tpu.matmul %90, %91, %cst_66 {dimension_numbers = #tpu.dot_dimension_numbers<[1], [0], [0], [1], [0, 0, 1, 1], [], []>} : vector<32x32xbf16>, vector<32x72xbf16>, vector<32x72xf32> -> vector<32x72xf32>
    %93 = arith.addf %88, %92 : vector<32x72xf32>
    %c12 = arith.constant 12 : index
    %c0_67 = arith.constant 0 : index
    %c0_68 = arith.constant 0 : index
    %94 = vector.load %arg3[%c12, %c0_67, %c0_68] : memref<18x32x32xbf16, #tpu.memory_space<vmem>>, vector<1x32x32xbf16>
    %95 = vector.shape_cast %94 : vector<1x32x32xbf16> to vector<32x32xbf16>
    %96 = vector.extract_strided_slice %77 {offsets = [0, 6], sizes = [32, 72], strides = [1, 1]} : vector<32x86xbf16> to vector<32x72xbf16>
    %cst_69 = arith.constant dense<0.000000e+00> : vector<32x72xf32>
    %97 = tpu.matmul %95, %96, %cst_69 {dimension_numbers = #tpu.dot_dimension_numbers<[1], [0], [0], [1], [0, 0, 1, 1], [], []>} : vector<32x32xbf16>, vector<32x72xbf16>, vector<32x72xf32> -> vector<32x72xf32>
    %98 = arith.addf %93, %97 : vector<32x72xf32>
    %c13 = arith.constant 13 : index
    %c0_70 = arith.constant 0 : index
    %c0_71 = arith.constant 0 : index
    %99 = vector.load %arg3[%c13, %c0_70, %c0_71] : memref<18x32x32xbf16, #tpu.memory_space<vmem>>, vector<1x32x32xbf16>
    %100 = vector.shape_cast %99 : vector<1x32x32xbf16> to vector<32x32xbf16>
    %101 = vector.extract_strided_slice %77 {offsets = [0, 7], sizes = [32, 72], strides = [1, 1]} : vector<32x86xbf16> to vector<32x72xbf16>
    %cst_72 = arith.constant dense<0.000000e+00> : vector<32x72xf32>
    %102 = tpu.matmul %100, %101, %cst_72 {dimension_numbers = #tpu.dot_dimension_numbers<[1], [0], [0], [1], [0, 0, 1, 1], [], []>} : vector<32x32xbf16>, vector<32x72xbf16>, vector<32x72xf32> -> vector<32x72xf32>
    %103 = arith.addf %98, %102 : vector<32x72xf32>
    %c14 = arith.constant 14 : index
    %c0_73 = arith.constant 0 : index
    %c0_74 = arith.constant 0 : index
    %104 = vector.load %arg3[%c14, %c0_73, %c0_74] : memref<18x32x32xbf16, #tpu.memory_space<vmem>>, vector<1x32x32xbf16>
    %105 = vector.shape_cast %104 : vector<1x32x32xbf16> to vector<32x32xbf16>
    %106 = vector.extract_strided_slice %77 {offsets = [0, 8], sizes = [32, 72], strides = [1, 1]} : vector<32x86xbf16> to vector<32x72xbf16>
    %cst_75 = arith.constant dense<0.000000e+00> : vector<32x72xf32>
    %107 = tpu.matmul %105, %106, %cst_75 {dimension_numbers = #tpu.dot_dimension_numbers<[1], [0], [0], [1], [0, 0, 1, 1], [], []>} : vector<32x32xbf16>, vector<32x72xbf16>, vector<32x72xf32> -> vector<32x72xf32>
    %108 = arith.addf %103, %107 : vector<32x72xf32>
    %c15 = arith.constant 15 : index
    %c0_76 = arith.constant 0 : index
    %c0_77 = arith.constant 0 : index
    %109 = vector.load %arg3[%c15, %c0_76, %c0_77] : memref<18x32x32xbf16, #tpu.memory_space<vmem>>, vector<1x32x32xbf16>
    %110 = vector.shape_cast %109 : vector<1x32x32xbf16> to vector<32x32xbf16>
    %111 = vector.extract_strided_slice %77 {offsets = [0, 12], sizes = [32, 72], strides = [1, 1]} : vector<32x86xbf16> to vector<32x72xbf16>
    %cst_78 = arith.constant dense<0.000000e+00> : vector<32x72xf32>
    %112 = tpu.matmul %110, %111, %cst_78 {dimension_numbers = #tpu.dot_dimension_numbers<[1], [0], [0], [1], [0, 0, 1, 1], [], []>} : vector<32x32xbf16>, vector<32x72xbf16>, vector<32x72xf32> -> vector<32x72xf32>
    %113 = arith.addf %108, %112 : vector<32x72xf32>
    %c16 = arith.constant 16 : index
    %c0_79 = arith.constant 0 : index
    %c0_80 = arith.constant 0 : index
    %114 = vector.load %arg3[%c16, %c0_79, %c0_80] : memref<18x32x32xbf16, #tpu.memory_space<vmem>>, vector<1x32x32xbf16>
    %115 = vector.shape_cast %114 : vector<1x32x32xbf16> to vector<32x32xbf16>
    %116 = vector.extract_strided_slice %77 {offsets = [0, 13], sizes = [32, 72], strides = [1, 1]} : vector<32x86xbf16> to vector<32x72xbf16>
    %cst_81 = arith.constant dense<0.000000e+00> : vector<32x72xf32>
    %117 = tpu.matmul %115, %116, %cst_81 {dimension_numbers = #tpu.dot_dimension_numbers<[1], [0], [0], [1], [0, 0, 1, 1], [], []>} : vector<32x32xbf16>, vector<32x72xbf16>, vector<32x72xf32> -> vector<32x72xf32>
    %118 = arith.addf %113, %117 : vector<32x72xf32>
    %c17 = arith.constant 17 : index
    %c0_82 = arith.constant 0 : index
    %c0_83 = arith.constant 0 : index
    %119 = vector.load %arg3[%c17, %c0_82, %c0_83] : memref<18x32x32xbf16, #tpu.memory_space<vmem>>, vector<1x32x32xbf16>
    %120 = vector.shape_cast %119 : vector<1x32x32xbf16> to vector<32x32xbf16>
    %121 = vector.extract_strided_slice %77 {offsets = [0, 14], sizes = [32, 72], strides = [1, 1]} : vector<32x86xbf16> to vector<32x72xbf16>
    %cst_84 = arith.constant dense<0.000000e+00> : vector<32x72xf32>
    %122 = tpu.matmul %120, %121, %cst_84 {dimension_numbers = #tpu.dot_dimension_numbers<[1], [0], [0], [1], [0, 0, 1, 1], [], []>} : vector<32x32xbf16>, vector<32x72xbf16>, vector<32x72xf32> -> vector<32x72xf32>
    %123 = arith.addf %118, %122 : vector<32x72xf32>
    %c1_85 = arith.constant 1 : index
    %c0_86 = arith.constant 0 : index
    %c0_87 = arith.constant 0 : index
    %124 = vector.load %arg4[%c1_85, %c0_86, %c0_87] : memref<2x32x1xf32, #tpu.memory_space<vmem>>, vector<1x32x1xf32>
    %125 = vector.shape_cast %124 : vector<1x32x1xf32> to vector<32x1xf32>
    %126 = vector.broadcast %125 : vector<32x1xf32> to vector<32x72xf32>
    %127 = arith.addf %123, %126 : vector<32x72xf32>
    %cst_88 = arith.constant 0.000000e+00 : f32
    %128 = vector.broadcast %cst_88 : f32 to vector<32x72xf32>
    %129 = arith.maximumf %127, %128 : vector<32x72xf32>
    %130 = arith.truncf %129 : vector<32x72xf32> to vector<32x72xbf16>
    %c1_89 = arith.constant 1 : index
    %c0_90 = arith.constant 0 : index
    %c0_91 = arith.constant 0 : index
    %131 = vector.load %arg5[%c1_89, %c0_90, %c0_91] : memref<2x32x32xbf16, #tpu.memory_space<vmem>>, vector<1x32x32xbf16>
    %132 = vector.shape_cast %131 : vector<1x32x32xbf16> to vector<32x32xbf16>
    %cst_92 = arith.constant dense<0.000000e+00> : vector<32x72xf32>
    %133 = tpu.matmul %132, %130, %cst_92 {dimension_numbers = #tpu.dot_dimension_numbers<[1], [0], [0], [1], [0, 0, 1, 1], [], []>} : vector<32x32xbf16>, vector<32x72xbf16>, vector<32x72xf32> -> vector<32x72xf32>
    %c1_93 = arith.constant 1 : index
    %c0_94 = arith.constant 0 : index
    %c0_95 = arith.constant 0 : index
    %134 = vector.load %arg6[%c1_93, %c0_94, %c0_95] : memref<2x32x1xf32, #tpu.memory_space<vmem>>, vector<1x32x1xf32>
    %135 = vector.shape_cast %134 : vector<1x32x1xf32> to vector<32x1xf32>
    %136 = vector.broadcast %135 : vector<32x1xf32> to vector<32x72xf32>
    %137 = arith.addf %133, %136 : vector<32x72xf32>
    %c0_96 = arith.constant 0 : index
    %c7_97 = arith.constant 7 : index
    %138 = vector.load %arg8[%c0_96, %c7_97] : memref<32x86xf32, #tpu.memory_space<vmem>>, vector<32x72xf32>
    %139 = arith.addf %137, %138 : vector<32x72xf32>
    %140 = vector.broadcast %4 : vector<1x72xf32> to vector<32x72xf32>
    %141 = arith.mulf %139, %140 : vector<32x72xf32>
    %c0_98 = arith.constant 0 : index
    %c7_99 = arith.constant 7 : index
    %142 = vector.load %arg8[%c0_98, %c7_99] : memref<32x86xf32, #tpu.memory_space<vmem>>, vector<32x72xf32>
    tpu.vector_store %arg8[%c0_98, %c7_99], %141 {strides = array<i32>} : memref<32x86xf32, #tpu.memory_space<vmem>>, vector<32x72xf32>,
    %c0_100 = arith.constant 0 : index
    %c7_101 = arith.constant 7 : index
    %143 = vector.load %arg8[%c0_100, %c7_101] : memref<32x86xf32, #tpu.memory_space<vmem>>, vector<32x72xf32>
    %c0_102 = arith.constant 0 : index
    %c0_103 = arith.constant 0 : index
    %144 = vector.load %arg7[%c0_102, %c0_103] : memref<32x72xf32, #tpu.memory_space<vmem>>, vector<32x72xf32>
    tpu.vector_store %arg7[%c0_102, %c0_103], %143 {strides = array<i32>} : memref<32x72xf32, #tpu.memory_space<vmem>>, vector<32x72xf32>,
    return
  }
  func.func @transform_0(%arg0: i32) -> (i32, i32) {
    %c0_i32 = arith.constant 0 : i32
    %c0_i32_0 = arith.constant 0 : i32
    %c0_i32_1 = arith.constant 0 : i32
    return %c0_i32, %c0_i32_0 : i32, i32
  }
  func.func @transform_1(%arg0: i32) -> (i32, i32) {
    %c0_i32 = arith.constant 0 : i32
    %c0_i32_0 = arith.constant 0 : i32
    %c0_i32_1 = arith.constant 0 : i32
    return %c0_i32, %c0_i32_0 : i32, i32
  }
  func.func @transform_2(%arg0: i32) -> (i32, i32, i32) {
    %c0_i32 = arith.constant 0 : i32
    %c0_i32_0 = arith.constant 0 : i32
    %c0_i32_1 = arith.constant 0 : i32
    %c0_i32_2 = arith.constant 0 : i32
    return %c0_i32, %c0_i32_0, %c0_i32_1 : i32, i32, i32
  }
  func.func @transform_3(%arg0: i32) -> (i32, i32, i32) {
    %c0_i32 = arith.constant 0 : i32
    %c0_i32_0 = arith.constant 0 : i32
    %c0_i32_1 = arith.constant 0 : i32
    %c0_i32_2 = arith.constant 0 : i32
    return %c0_i32, %c0_i32_0, %c0_i32_1 : i32, i32, i32
  }
  func.func @transform_4(%arg0: i32) -> (i32, i32, i32) {
    %c0_i32 = arith.constant 0 : i32
    %c0_i32_0 = arith.constant 0 : i32
    %c0_i32_1 = arith.constant 0 : i32
    %c0_i32_2 = arith.constant 0 : i32
    return %c0_i32, %c0_i32_0, %c0_i32_1 : i32, i32, i32
  }
  func.func @transform_5(%arg0: i32) -> (i32, i32, i32) {
    %c0_i32 = arith.constant 0 : i32
    %c0_i32_0 = arith.constant 0 : i32
    %c0_i32_1 = arith.constant 0 : i32
    %c0_i32_2 = arith.constant 0 : i32
    return %c0_i32, %c0_i32_0, %c0_i32_1 : i32, i32, i32
  }
  func.func @transform_6(%arg0: i32) -> (i32, i32) {
    %c0_i32 = arith.constant 0 : i32
    %c0_i32_0 = arith.constant 0 : i32
    %c0_i32_1 = arith.constant 0 : i32
    return %c0_i32, %c0_i32_0 : i32, i32
  }
}

</mosaic_0001>

<llo_original>
// kernel: encoder_forward.3
$region0: #{encoder_forward.3}
  #allocation0 [shape = 'u32[]', space=smem, size = 0x4, offset = 0x4, fixed_abs, tag = 'smem constant byte address 0x4 - core index']
  #allocation1 [shape = 'u32[144,128]{1,0:T(1,128)}', space=vmem, size = 0x12000, scoped, tag = 'internal scratch']
  %s0 = inlined_call_operand.vmem [shape: bf16[16,128], index: 0, kind: input, shape index: {}]
  %s1 = inlined_call_operand.vmem [shape: bf16[16,16], index: 1, kind: input, shape index: {}]
  %s2 = inlined_call_operand.vmem [shape: f32[16,1], index: 2, kind: input, shape index: {}]
  %s3 = inlined_call_operand.vmem [shape: f32[16,128], index: 3, kind: output, shape index: {}]
  %s4 = sld [smem:[#allocation0]]
  $region22: #{encoder_forward.3} parent=0
    _
  %s6 = ssub.s32 1, %s4
  %s7 = scalar_select 0, %s6, %s4
  // Predicated region
  $region2: #{encoder_forward.3} parent=0 // pred_check
    _
  $region3: #{encoder_forward.3} parent=0 // pred_check_branch
    %9 = sbr.rel (0) target = $region5
  $region4: #{encoder_forward.3} parent=0 // pred_region
    _
  $region5: #{encoder_forward.3} parent=0 // pred_fallthru
    _
  // Predicated region
  $region6: #{encoder_forward.3} parent=0 // pred_check
    _
  $region7: #{encoder_forward.3} parent=0 // pred_check_branch
    %11 = sbr.rel (0) target = $region9
  $region8: #{encoder_forward.3} parent=0 // pred_region
    _
  $region9: #{encoder_forward.3} parent=0 // pred_fallthru
    _
  // Predicated region
  $region10: #{encoder_forward.3} parent=0 // pred_check
    _
  $region11: #{encoder_forward.3} parent=0 // pred_check_branch
    %13 = sbr.rel (0) target = $region13
  $region12: #{encoder_forward.3} parent=0 // pred_region
    _
  $region13: #{encoder_forward.3} parent=0 // pred_fallthru
    _
  %v15 = vld [vmem:[%s1] sm:$0xf]
  %v16 = vld [vmem:[%s1 + $0x4] sm:$0xf]
  %v17 = vld [vmem:[%s0] sm:$0xf]
  %v18 = vld [vmem:[%s0 + $0x4] sm:$0xf]
  %v19 = vld [vmem:[%s2] sm:$0xff]
  %v20 = vld [vmem:[%s2 + $0x8] sm:$0xff]
  %22 = vset.pattern.permute.xlu0 0
  %23 = vperm.xlu0 %22, %v19
  %v24 = vpop.permute.xlu0 %23
  %27 = vset.pattern.permute.xlu0 0
  %28 = vperm.xlu0 %27, %v20
  %v29 = vpop.permute.xlu0 %28
  %v33 = vunpack.c.l.b16 %v15
  %v34 = vunpack.c.l.b16 %v16
  %v35 = vpack.c.b16 %v34, %v33
  %v38 = vunpack.c.l.b16 %v17
  %v39 = vunpack.c.l.b16 %v18
  %v40 = vpack.c.b16 %v39, %v38
  %vm42 = vcmask 130048
  %v44 = vsel %vm42, %v35, 0
  %46 = vmatprep.subr.bf16.mxu0 0
  %47 = vmatpush1.bf16.msra.mxu0 0
  %48 = vmatprep.subr.bf16.mxu0 0
  %49 = vmatpush1.bf16.msra.mxu0 0
  %50 = vmatprep.subr.bf16.mxu0 0
  %51 = vmatpush1.bf16.msra.mxu0 0
  %52 = vmatprep.subr.bf16.mxu0 0
  %53 = vmatpush1.bf16.msra.mxu0 0
  %54 = vmatprep.subr.bf16.mxu0 0
  %55 = vmatpush1.bf16.msra.mxu0 0
  %56 = vmatprep.subr.bf16.mxu0 0
  %57 = vmatpush1.bf16.msra.mxu0 0
  %58 = vmatprep.subr.bf16.mxu0 0
  %59 = vmatpush1.bf16.msra.mxu0 0
  %60 = vmatprep.subr.bf16.mxu0 0
  %61 = vmatpush1.bf16.msra.mxu0 %v40
  %62 = vmatprep.subr.bf16.mxu0 0
  %63 = vmatpush2.bf16.msra.mxu0 0
  %64 = vmatprep.subr.bf16.mxu0 0
  %65 = vmatpush2.bf16.msra.mxu0 0
  %66 = vmatprep.subr.bf16.mxu0 0
  %67 = vmatpush2.bf16.msra.mxu0 0
  %68 = vmatprep.subr.bf16.mxu0 0
  %69 = vmatpush2.bf16.msra.mxu0 0
  %70 = vmatprep.subr.bf16.mxu0 0
  %71 = vmatpush2.bf16.msra.mxu0 0
  %72 = vmatprep.subr.bf16.mxu0 0
  %73 = vmatpush2.bf16.msra.mxu0 0
  %74 = vmatprep.subr.bf16.mxu0 0
  %75 = vmatpush2.bf16.msra.mxu0 0
  %76 = vmatprep.subr.bf16.mxu0 0
  %77 = vmatpush2.bf16.msra.mxu0 0
  %78 = vmatprep.mubr.bf16.mxu0 0
  %79 = vmatmul.mubr.bf16.gmra.mxu0 %v44
  %v80 = vpop.f32.mrf.mxu0
  %v81 = vadd.f32 %v24, %v80
  %v82 = vpop.f32.mrf.mxu0
  %v83 = vpop.f32.mrf.mxu0
  %v84 = vadd.f32 %v29, %v83
  %v85 = vpop.f32.mrf.mxu0
  %86 = vdwg.mxu0
  %v87 = vmax.f32 %v81, 0.0
  %v88 = vmax.f32 %v84, 0.0
  %89 = vst [vmem:[%s3] sm:$0xff] %v87
  %90 = vst [vmem:[%s3 + $0x8] sm:$0xff] %v88
  // Predicated region
  $region14: #{encoder_forward.3} parent=0 // pred_check
    _
  $region15: #{encoder_forward.3} parent=0 // pred_check_branch
    %92 = sbr.rel (0) target = $region17
  $region16: #{encoder_forward.3} parent=0 // pred_region
    _
  $region17: #{encoder_forward.3} parent=0 // pred_fallthru
    _
  // Predicated region
  $region18: #{encoder_forward.3} parent=0 // pred_check
    _
  $region19: #{encoder_forward.3} parent=0 // pred_check_branch
    %94 = sbr.rel (0) target = $region21
  $region20: #{encoder_forward.3} parent=0 // pred_region
    _
  $region21: #{encoder_forward.3} parent=0 // pred_fallthru
    _

// kernel: encoder_forward.4
$region0: #{encoder_forward.4}
  #allocation0 [shape = 'u32[]', space=smem, size = 0x4, offset = 0x4, fixed_abs, tag = 'smem constant byte address 0x4 - core index']
  #allocation1 [shape = 'u32[144,128]{1,0:T(1,128)}', space=vmem, size = 0x12000, scoped, tag = 'internal scratch']
  %s0 = inlined_call_operand.vmem [shape: bf16[256,32], index: 0, kind: input, shape index: {}]
  %s1 = inlined_call_operand.vmem [shape: bf16[32,256], index: 1, kind: input, shape index: {}]
  %s2 = inlined_call_operand.vmem [shape: f32[32,32], index: 2, kind: output, shape index: {}]
  %s3 = sld [smem:[#allocation0]]
  $region18: #{encoder_forward.4} parent=0
    _
  %s5 = ssub.s32 1, %s3
  %s6 = scalar_select 0, %s5, %s3
  // Predicated region
  $region2: #{encoder_forward.4} parent=0 // pred_check
    _
  $region3: #{encoder_forward.4} parent=0 // pred_check_branch
    %8 = sbr.rel (0) target = $region5
  $region4: #{encoder_forward.4} parent=0 // pred_region
    _
  $region5: #{encoder_forward.4} parent=0 // pred_fallthru
    _
  // Predicated region
  $region6: #{encoder_forward.4} parent=0 // pred_check
    _
  $region7: #{encoder_forward.4} parent=0 // pred_check_branch
    %10 = sbr.rel (0) target = $region9
  $region8: #{encoder_forward.4} parent=0 // pred_region
    _
  $region9: #{encoder_forward.4} parent=0 // pred_fallthru
    _
  %v12 = vld [vmem:[%s1] sm:$0xff]
  %v13 = vld [vmem:[%s1 + $0x8] sm:$0xff]
  %v14 = vld [vmem:[%s1 + $0x10] sm:$0xff]
  %v15 = vld [vmem:[%s1 + $0x18] sm:$0xff]
  %v16 = vld [vmem:[%s0] sm:$0xf]
  %v17 = vld [vmem:[%s0 + $0x4] sm:$0xf]
  %v18 = vld [vmem:[%s0 + $0x8] sm:$0xf]
  %v19 = vld [vmem:[%s0 + $0xc] sm:$0xf]
  %v20 = vld [vmem:[%s0 + $0x10] sm:$0xf]
  %v21 = vld [vmem:[%s0 + $0x14] sm:$0xf]
  %v22 = vld [vmem:[%s0 + $0x18] sm:$0xf]
  %v23 = vld [vmem:[%s0 + $0x1c] sm:$0xf]
  %v24 = vld [vmem:[%s0 + $0x20] sm:$0xf]
  %v25 = vld [vmem:[%s0 + $0x24] sm:$0xf]
  %v26 = vld [vmem:[%s0 + $0x28] sm:$0xf]
  %v27 = vld [vmem:[%s0 + $0x2c] sm:$0xf]
  %v28 = vld [vmem:[%s0 + $0x30] sm:$0xf]
  %v29 = vld [vmem:[%s0 + $0x34] sm:$0xf]
  %v30 = vld [vmem:[%s0 + $0x38] sm:$0xf]
  %v31 = vld [vmem:[%s0 + $0x3c] sm:$0xf]
  %v32 = vld [vmem:[%s0 + $0x40] sm:$0xf]
  %v33 = vld [vmem:[%s0 + $0x44] sm:$0xf]
  %v34 = vld [vmem:[%s0 + $0x48] sm:$0xf]
  %v35 = vld [vmem:[%s0 + $0x4c] sm:$0xf]
  %v36 = vld [vmem:[%s0 + $0x50] sm:$0xf]
  %v37 = vld [vmem:[%s0 + $0x54] sm:$0xf]
  %v38 = vld [vmem:[%s0 + $0x58] sm:$0xf]
  %v39 = vld [vmem:[%s0 + $0x5c] sm:$0xf]
  %v40 = vld [vmem:[%s0 + $0x60] sm:$0xf]
  %v41 = vld [vmem:[%s0 + $0x64] sm:$0xf]
  %v42 = vld [vmem:[%s0 + $0x68] sm:$0xf]
  %v43 = vld [vmem:[%s0 + $0x6c] sm:$0xf]
  %v44 = vld [vmem:[%s0 + $0x70] sm:$0xf]
  %v45 = vld [vmem:[%s0 + $0x74] sm:$0xf]
  %v46 = vld [vmem:[%s0 + $0x78] sm:$0xf]
  %v47 = vld [vmem:[%s0 + $0x7c] sm:$0xf]
  %v52 = vunpack.c.l.b16 %v12
  %v53 = vunpack.c.h.b16 %v12
  %v54 = vunpack.c.l.b16 %v13
  %v55 = vunpack.c.h.b16 %v13
  %v56 = vunpack.c.l.b16 %v14
  %v57 = vunpack.c.h.b16 %v14
  %v58 = vunpack.c.l.b16 %v15
  %v59 = vunpack.c.h.b16 %v15
  %v60 = vpack.c.b16 %v54, %v52
  %v61 = vpack.c.b16 %v55, %v53
  %v62 = vpack.c.b16 %v58, %v56
  %v63 = vpack.c.b16 %v59, %v57
  %v100 = vunpack.c.l.b16 %v16
  %v101 = vunpack.c.l.b16 %v17
  %v102 = vunpack.c.l.b16 %v18
  %v103 = vunpack.c.l.b16 %v19
  %v104 = vunpack.c.l.b16 %v20
  %v105 = vunpack.c.l.b16 %v21
  %v106 = vunpack.c.l.b16 %v22
  %v107 = vunpack.c.l.b16 %v23
  %v108 = vunpack.c.l.b16 %v24
  %v109 = vunpack.c.l.b16 %v25
  %v110 = vunpack.c.l.b16 %v26
  %v111 = vunpack.c.l.b16 %v27
  %v112 = vunpack.c.l.b16 %v28
  %v113 = vunpack.c.l.b16 %v29
  %v114 = vunpack.c.l.b16 %v30
  %v115 = vunpack.c.l.b16 %v31
  %v116 = vunpack.c.l.b16 %v32
  %v117 = vunpack.c.l.b16 %v33
  %v118 = vunpack.c.l.b16 %v34
  %v119 = vunpack.c.l.b16 %v35
  %v120 = vunpack.c.l.b16 %v36
  %v121 = vunpack.c.l.b16 %v37
  %v122 = vunpack.c.l.b16 %v38
  %v123 = vunpack.c.l.b16 %v39
  %v124 = vunpack.c.l.b16 %v40
  %v125 = vunpack.c.l.b16 %v41
  %v126 = vunpack.c.l.b16 %v42
  %v127 = vunpack.c.l.b16 %v43
  %v128 = vunpack.c.l.b16 %v44
  %v129 = vunpack.c.l.b16 %v45
  %v130 = vunpack.c.l.b16 %v46
  %v131 = vunpack.c.l.b16 %v47
  %v132 = vpack.c.b16 %v101, %v100
  %v133 = vpack.c.b16 %v103, %v102
  %v134 = vpack.c.b16 %v105, %v104
  %v135 = vpack.c.b16 %v107, %v106
  %v136 = vpack.c.b16 %v109, %v108
  %v137 = vpack.c.b16 %v111, %v110
  %v138 = vpack.c.b16 %v113, %v112
  %v139 = vpack.c.b16 %v115, %v114
  %v140 = vpack.c.b16 %v117, %v116
  %v141 = vpack.c.b16 %v119, %v118
  %v142 = vpack.c.b16 %v121, %v120
  %v143 = vpack.c.b16 %v123, %v122
  %v144 = vpack.c.b16 %v125, %v124
  %v145 = vpack.c.b16 %v127, %v126
  %v146 = vpack.c.b16 %v129, %v128
  %v147 = vpack.c.b16 %v131, %v130
  %164 = vmatprep.subr.bf16.mxu0 0
  %165 = vmatpush1.bf16.msra.mxu0 %v139
  %166 = vmatprep.subr.bf16.mxu0 0
  %167 = vmatpush1.bf16.msra.mxu0 %v138
  %168 = vmatprep.subr.bf16.mxu0 0
  %169 = vmatpush1.bf16.msra.mxu0 %v137
  %170 = vmatprep.subr.bf16.mxu0 0
  %171 = vmatpush1.bf16.msra.mxu0 %v136
  %172 = vmatprep.subr.bf16.mxu0 0
  %173 = vmatpush1.bf16.msra.mxu0 %v135
  %174 = vmatprep.subr.bf16.mxu0 0
  %175 = vmatpush1.bf16.msra.mxu0 %v134
  %176 = vmatprep.subr.bf16.mxu0 0
  %177 = vmatpush1.bf16.msra.mxu0 %v133
  %178 = vmatprep.subr.bf16.mxu0 0
  %179 = vmatpush1.bf16.msra.mxu0 %v132
  %180 = vmatprep.subr.bf16.mxu0 0
  %181 = vmatpush2.bf16.msra.mxu0 %v147
  %182 = vmatprep.subr.bf16.mxu0 0
  %183 = vmatpush2.bf16.msra.mxu0 %v146
  %184 = vmatprep.subr.bf16.mxu0 0
  %185 = vmatpush2.bf16.msra.mxu0 %v145
  %186 = vmatprep.subr.bf16.mxu0 0
  %187 = vmatpush2.bf16.msra.mxu0 %v144
  %188 = vmatprep.subr.bf16.mxu0 0
  %189 = vmatpush2.bf16.msra.mxu0 %v143
  %190 = vmatprep.subr.bf16.mxu0 0
  %191 = vmatpush2.bf16.msra.mxu0 %v142
  %192 = vmatprep.subr.bf16.mxu0 0
  %193 = vmatpush2.bf16.msra.mxu0 %v141
  %194 = vmatprep.subr.bf16.mxu0 0
  %195 = vmatpush2.bf16.msra.mxu0 %v140
  %196 = vmatprep.mubr.bf16.mxu0 %v61
  %197 = vmatmul.mubr.bf16.gmra.mxu0 %v60
  %v198 = vpop.f32.mrf.mxu0
  %v199 = vadd.f32 0.0, %v198
  %v200 = vpop.f32.mrf.mxu0
  %v201 = vpop.f32.mrf.mxu0
  %v202 = vadd.f32 0.0, %v201
  %v203 = vpop.f32.mrf.mxu0
  %204 = vmatprep.mubr.bf16.mxu0 %v63
  %205 = vmatmul.mubr.bf16.gmra.mxu0 %v62
  %v206 = vpop.f32.mrf.mxu0
  %v207 = vadd.f32 0.0, %v206
  %v208 = vpop.f32.mrf.mxu0
  %v209 = vpop.f32.mrf.mxu0
  %v210 = vadd.f32 0.0, %v209
  %v211 = vpop.f32.mrf.mxu0
  %212 = vdwg.mxu0
  %vm213 = vcmask 261120
  %214 = vst.msk [vmem:[%s2] sm:$0xff] %vm213, %v199
  %215 = vst.msk [vmem:[%s2 + $0x8] sm:$0xff] %vm213, %v202
  %216 = vst.msk [vmem:[%s2 + $0x10] sm:$0xff] %vm213, %v207
  %217 = vst.msk [vmem:[%s2 + $0x18] sm:$0xff] %vm213, %v210
  // Predicated region
  $region10: #{encoder_forward.4} parent=0 // pred_check
    _
  $region11: #{encoder_forward.4} parent=0 // pred_check_branch
    %219 = sbr.rel (0) target = $region13
  $region12: #{encoder_forward.4} parent=0 // pred_region
    _
  $region13: #{encoder_forward.4} parent=0 // pred_fallthru
    _
  // Predicated region
  $region14: #{encoder_forward.4} parent=0 // pred_check
    _
  $region15: #{encoder_forward.4} parent=0 // pred_check_branch
    %221 = sbr.rel (0) target = $region17
  $region16: #{encoder_forward.4} parent=0 // pred_region
    _
  $region17: #{encoder_forward.4} parent=0 // pred_fallthru
    _

// kernel: encoder_forward.5
$region0: #{encoder_forward.5}
  #allocation0 [shape = 'u32[]', space=smem, size = 0x4, offset = 0x4, fixed_abs, tag = 'smem constant byte address 0x4 - core index']
  #allocation1 [shape = 'u32[144,128]{1,0:T(1,128)}', space=vmem, size = 0x12000, scoped, tag = 'internal scratch']
  #allocation2 [shape = 'f32[32,86]{1,0:T(8,128)}', space=vmem, size = 0x4000, scoped, tag = 'scratch operand']
  %s0 = inlined_call_operand.vmem [shape: f32[32,72], index: 0, kind: input, shape index: {}]
  %s1 = inlined_call_operand.vmem [shape: f32[1,72], index: 1, kind: input, shape index: {}]
  %s2 = inlined_call_operand.vmem [shape: bf16[18,32,32], index: 2, kind: input, shape index: {}]
  %s3 = inlined_call_operand.vmem [shape: f32[2,32,1], index: 3, kind: input, shape index: {}]
  %s4 = inlined_call_operand.vmem [shape: bf16[2,32,32], index: 4, kind: input, shape index: {}]
  %s5 = inlined_call_operand.vmem [shape: f32[2,32,1], index: 5, kind: input, shape index: {}]
  %s6 = inlined_call_operand.vmem [shape: f32[32,72], index: 6, kind: output, shape index: {}]
  %s7 = sld [smem:[#allocation0]]
  $region34: #{encoder_forward.5} parent=0
    _
  %s9 = ssub.s32 1, %s7
  %s10 = scalar_select 0, %s9, %s7
  // Predicated region
  $region2: #{encoder_forward.5} parent=0 // pred_check
    _
  $region3: #{encoder_forward.5} parent=0 // pred_check_branch
    %12 = sbr.rel (0) target = $region5
  $region4: #{encoder_forward.5} parent=0 // pred_region
    _
  $region5: #{encoder_forward.5} parent=0 // pred_fallthru
    _
  // Predicated region
  $region6: #{encoder_forward.5} parent=0 // pred_check
    _
  $region7: #{encoder_forward.5} parent=0 // pred_check_branch
    %14 = sbr.rel (0) target = $region9
  $region8: #{encoder_forward.5} parent=0 // pred_region
    _
  $region9: #{encoder_forward.5} parent=0 // pred_fallthru
    _
  // Predicated region
  $region10: #{encoder_forward.5} parent=0 // pred_check
    _
  $region11: #{encoder_forward.5} parent=0 // pred_check_branch
    %16 = sbr.rel (0) target = $region13
  $region12: #{encoder_forward.5} parent=0 // pred_region
    _
  $region13: #{encoder_forward.5} parent=0 // pred_fallthru
    _
  // Predicated region
  $region14: #{encoder_forward.5} parent=0 // pred_check
    _
  $region15: #{encoder_forward.5} parent=0 // pred_check_branch
    %18 = sbr.rel (0) target = $region17
  $region16: #{encoder_forward.5} parent=0 // pred_region
    _
  $region17: #{encoder_forward.5} parent=0 // pred_fallthru
    _
  // Predicated region
  $region18: #{encoder_forward.5} parent=0 // pred_check
    _
  $region19: #{encoder_forward.5} parent=0 // pred_check_branch
    %20 = sbr.rel (0) target = $region21
  $region20: #{encoder_forward.5} parent=0 // pred_region
    _
  $region21: #{encoder_forward.5} parent=0 // pred_fallthru
    _
  // Predicated region
  $region22: #{encoder_forward.5} parent=0 // pred_check
    _
  $region23: #{encoder_forward.5} parent=0 // pred_check_branch
    %22 = sbr.rel (0) target = $region25
  $region24: #{encoder_forward.5} parent=0 // pred_region
    _
  $region25: #{encoder_forward.5} parent=0 // pred_fallthru
    _
  %vm24 = vcmask 703488
  %25 = vst.msk [vmem:[#allocation2] sm:$0xff] %vm24, 0.0
  %26 = vst.msk [vmem:[#allocation2 + $0x8] sm:$0xff] %vm24, 0.0
  %27 = vst.msk [vmem:[#allocation2 + $0x10] sm:$0xff] %vm24, 0.0
  %28 = vst.msk [vmem:[#allocation2 + $0x18] sm:$0xff] %vm24, 0.0
  %v29 = vld [vmem:[%s0] sm:$0xff]
  %v30 = vld [vmem:[%s0 + $0x8] sm:$0xff]
  %v31 = vld [vmem:[%s0 + $0x10] sm:$0xff]
  %v32 = vld [vmem:[%s0 + $0x18] sm:$0xff]
  %37 = vrot.lane.b32.xlu0 %v29, 7
  %v38 = vpop.permute.xlu0 %37
  %39 = vrot.lane.b32.xlu0 %v30, 7
  %v40 = vpop.permute.xlu0 %39
  %41 = vrot.lane.b32.xlu0 %v31, 7
  %v42 = vpop.permute.xlu0 %41
  %43 = vrot.lane.b32.xlu0 %v32, 7
  %v44 = vpop.permute.xlu0 %43
  %vm49 = vcmask 646200
  %50 = vst.msk [vmem:[#allocation2] sm:$0xff] %vm49, %v38
  %51 = vst.msk [vmem:[#allocation2 + $0x8] sm:$0xff] %vm49, %v40
  %52 = vst.msk [vmem:[#allocation2 + $0x10] sm:$0xff] %vm49, %v42
  %53 = vst.msk [vmem:[#allocation2 + $0x18] sm:$0xff] %vm49, %v44
  %v54 = vld [vmem:[%s1] sm:$0x1]
  %v55 = vld [vmem:[#allocation2] sm:$0xff]
  %v56 = vld [vmem:[#allocation2 + $0x8] sm:$0xff]
  %v57 = vld [vmem:[#allocation2 + $0x10] sm:$0xff]
  %v58 = vld [vmem:[#allocation2 + $0x18] sm:$0xff]
  %v59 = vmax.f32 %v55, 0.0
  %v60 = vmax.f32 %v56, 0.0
  %v61 = vmax.f32 %v57, 0.0
  %v62 = vmax.f32 %v58, 0.0
  %v63 = vpack.c.bf16 %v60, %v59
  %v64 = vpack.c.bf16 %v62, %v61
  %v65 = vld [vmem:[%s2] sm:$0xf]
  %v66 = vld [vmem:[%s2 + $0x4] sm:$0xf]
  %v67 = vld [vmem:[%s2 + $0x8] sm:$0xf]
  %v68 = vld [vmem:[%s2 + $0xc] sm:$0xf]
  %s69 = scalar_lea.vmem %s2, 16
  %v70 = vld [vmem:[%s69] sm:$0xf]
  %v71 = vld [vmem:[%s69 + $0x4] sm:$0xf]
  %v72 = vld [vmem:[%s69 + $0x8] sm:$0xf]
  %v73 = vld [vmem:[%s69 + $0xc] sm:$0xf]
  %v78 = vunpack.c.l.b16 %v70
  %v79 = vunpack.c.l.b16 %v71
  %v80 = vunpack.c.l.b16 %v72
  %v81 = vunpack.c.l.b16 %v73
  %v82 = vpack.c.b16 %v79, %v78
  %v83 = vpack.c.b16 %v81, %v80
  %86 = vrot.lane.b32.xlu0 %v63, 127
  %v87 = vpop.permute.xlu0 %86
  %88 = vrot.lane.b32.xlu0 %v64, 127
  %v89 = vpop.permute.xlu0 %88
  %vm92 = vcmask 261120
  %v94 = vsel %vm92, %v82, 0
  %v97 = vsel %vm92, %v83, 0
  %99 = vmatprep.subr.bf16.mxu0 0
  %100 = vmatpush1.bf16.msra.mxu0 0
  %101 = vmatprep.subr.bf16.mxu0 0
  %102 = vmatpush1.bf16.msra.mxu0 0
  %103 = vmatprep.subr.bf16.mxu0 0
  %104 = vmatpush1.bf16.msra.mxu0 0
  %105 = vmatprep.subr.bf16.mxu0 0
  %106 = vmatpush1.bf16.msra.mxu0 0
  %107 = vmatprep.subr.bf16.mxu0 0
  %108 = vmatpush1.bf16.msra.mxu0 0
  %109 = vmatprep.subr.bf16.mxu0 0
  %110 = vmatpush1.bf16.msra.mxu0 0
  %111 = vmatprep.subr.bf16.mxu0 0
  %112 = vmatpush1.bf16.msra.mxu0 %v89
  %113 = vmatprep.subr.bf16.mxu0 0
  %114 = vmatpush1.bf16.msra.mxu0 %v87
  %115 = vmatprep.subr.bf16.mxu0 0
  %116 = vmatpush2.bf16.msra.mxu0 0
  %117 = vmatprep.subr.bf16.mxu0 0
  %118 = vmatpush2.bf16.msra.mxu0 0
  %119 = vmatprep.subr.bf16.mxu0 0
  %120 = vmatpush2.bf16.msra.mxu0 0
  %121 = vmatprep.subr.bf16.mxu0 0
  %122 = vmatpush2.bf16.msra.mxu0 0
  %123 = vmatprep.subr.bf16.mxu0 0
  %124 = vmatpush2.bf16.msra.mxu0 0
  %125 = vmatprep.subr.bf16.mxu0 0
  %126 = vmatpush2.bf16.msra.mxu0 0
  %127 = vmatprep.subr.bf16.mxu0 0
  %128 = vmatpush2.bf16.msra.mxu0 0
  %129 = vmatprep.subr.bf16.mxu0 0
  %130 = vmatpush2.bf16.msra.mxu0 0
  %131 = vmatprep.mubr.bf16.mxu0 0
  %132 = vmatmul.mubr.bf16.gmra.mxu0 %v94
  %v133 = vpop.f32.mrf.mxu0
  %v134 = vadd.f32 0.0, %v133
  %v135 = vpop.f32.mrf.mxu0
  %v136 = vpop.f32.mrf.mxu0
  %v137 = vadd.f32 0.0, %v136
  %v138 = vpop.f32.mrf.mxu0
  %139 = vmatprep.mubr.bf16.mxu0 0
  %140 = vmatmul.mubr.bf16.gmra.mxu0 %v97
  %v141 = vpop.f32.mrf.mxu0
  %v142 = vadd.f32 0.0, %v141
  %v143 = vpop.f32.mrf.mxu0
  %v144 = vpop.f32.mrf.mxu0
  %v145 = vadd.f32 0.0, %v144
  %v146 = vpop.f32.mrf.mxu0
  %147 = vdwg.mxu0
  %v152 = vunpack.c.l.b16 %v65
  %v153 = vunpack.c.l.b16 %v66
  %v154 = vunpack.c.l.b16 %v67
  %v155 = vunpack.c.l.b16 %v68
  %v156 = vpack.c.b16 %v153, %v152
  %v157 = vpack.c.b16 %v155, %v154
  %v159 = vsel %vm92, %v156, 0
  %v162 = vsel %vm92, %v157, 0
  %164 = vmatprep.subr.bf16.mxu0 0
  %165 = vmatpush1.bf16.msra.mxu0 0
  %166 = vmatprep.subr.bf16.mxu0 0
  %167 = vmatpush1.bf16.msra.mxu0 0
  %168 = vmatprep.subr.bf16.mxu0 0
  %169 = vmatpush1.bf16.msra.mxu0 0
  %170 = vmatprep.subr.bf16.mxu0 0
  %171 = vmatpush1.bf16.msra.mxu0 0
  %172 = vmatprep.subr.bf16.mxu0 0
  %173 = vmatpush1.bf16.msra.mxu0 0
  %174 = vmatprep.subr.bf16.mxu0 0
  %175 = vmatpush1.bf16.msra.mxu0 0
  %176 = vmatprep.subr.bf16.mxu0 0
  %177 = vmatpush1.bf16.msra.mxu0 %v64
  %178 = vmatprep.subr.bf16.mxu0 0
  %179 = vmatpush1.bf16.msra.mxu0 %v63
  %180 = vmatprep.subr.bf16.mxu0 0
  %181 = vmatpush2.bf16.msra.mxu0 0
  %182 = vmatprep.subr.bf16.mxu0 0
  %183 = vmatpush2.bf16.msra.mxu0 0
  %184 = vmatprep.subr.bf16.mxu0 0
  %185 = vmatpush2.bf16.msra.mxu0 0
  %186 = vmatprep.subr.bf16.mxu0 0
  %187 = vmatpush2.bf16.msra.mxu0 0
  %188 = vmatprep.subr.bf16.mxu0 0
  %189 = vmatpush2.bf16.msra.mxu0 0
  %190 = vmatprep.subr.bf16.mxu0 0
  %191 = vmatpush2.bf16.msra.mxu0 0
  %192 = vmatprep.subr.bf16.mxu0 0
  %193 = vmatpush2.bf16.msra.mxu0 0
  %194 = vmatprep.subr.bf16.mxu0 0
  %195 = vmatpush2.bf16.msra.mxu0 0
  %196 = vmatprep.mubr.bf16.mxu0 0
  %197 = vmatmul.mubr.bf16.gmra.mxu0 %v159
  %v198 = vpop.f32.mrf.mxu0
  %v199 = vadd.f32 %v134, %v198
  %v200 = vpop.f32.mrf.mxu0
  %v201 = vpop.f32.mrf.mxu0
  %v202 = vadd.f32 %v137, %v201
  %v203 = vpop.f32.mrf.mxu0
  %204 = vmatprep.mubr.bf16.mxu0 0
  %205 = vmatmul.mubr.bf16.gmra.mxu0 %v162
  %v206 = vpop.f32.mrf.mxu0
  %v207 = vadd.f32 %v142, %v206
  %v208 = vpop.f32.mrf.mxu0
  %v209 = vpop.f32.mrf.mxu0
  %v210 = vadd.f32 %v145, %v209
  %v211 = vpop.f32.mrf.mxu0
  %212 = vdwg.mxu0
  %s213 = scalar_lea.vmem %s2, 32
  %v214 = vld [vmem:[%s213] sm:$0xf]
  %v215 = vld [vmem:[%s213 + $0x4] sm:$0xf]
  %v216 = vld [vmem:[%s213 + $0x8] sm:$0xf]
  %v217 = vld [vmem:[%s213 + $0xc] sm:$0xf]
  %v222 = vunpack.c.l.b16 %v214
  %v223 = vunpack.c.l.b16 %v215
  %v224 = vunpack.c.l.b16 %v216
  %v225 = vunpack.c.l.b16 %v217
  %v226 = vpack.c.b16 %v223, %v222
  %v227 = vpack.c.b16 %v225, %v224
  %228 = vrot.lane.b32.xlu0 %v63, 126
  %v229 = vpop.permute.xlu0 %228
  %230 = vrot.lane.b32.xlu0 %v64, 126
  %v231 = vpop.permute.xlu0 %230
  %v235 = vsel %vm92, %v226, 0
  %v238 = vsel %vm92, %v227, 0
  %240 = vmatprep.subr.bf16.mxu0 0
  %241 = vmatpush1.bf16.msra.mxu0 0
  %242 = vmatprep.subr.bf16.mxu0 0
  %243 = vmatpush1.bf16.msra.mxu0 0
  %244 = vmatprep.subr.bf16.mxu0 0
  %245 = vmatpush1.bf16.msra.mxu0 0
  %246 = vmatprep.subr.bf16.mxu0 0
  %247 = vmatpush1.bf16.msra.mxu0 0
  %248 = vmatprep.subr.bf16.mxu0 0
  %249 = vmatpush1.bf16.msra.mxu0 0
  %250 = vmatprep.subr.bf16.mxu0 0
  %251 = vmatpush1.bf16.msra.mxu0 0
  %252 = vmatprep.subr.bf16.mxu0 0
  %253 = vmatpush1.bf16.msra.mxu0 %v231
  %254 = vmatprep.subr.bf16.mxu0 0
  %255 = vmatpush1.bf16.msra.mxu0 %v229
  %256 = vmatprep.subr.bf16.mxu0 0
  %257 = vmatpush2.bf16.msra.mxu0 0
  %258 = vmatprep.subr.bf16.mxu0 0
  %259 = vmatpush2.bf16.msra.mxu0 0
  %260 = vmatprep.subr.bf16.mxu0 0
  %261 = vmatpush2.bf16.msra.mxu0 0
  %262 = vmatprep.subr.bf16.mxu0 0
  %263 = vmatpush2.bf16.msra.mxu0 0
  %264 = vmatprep.subr.bf16.mxu0 0
  %265 = vmatpush2.bf16.msra.mxu0 0
  %266 = vmatprep.subr.bf16.mxu0 0
  %267 = vmatpush2.bf16.msra.mxu0 0
  %268 = vmatprep.subr.bf16.mxu0 0
  %269 = vmatpush2.bf16.msra.mxu0 0
  %270 = vmatprep.subr.bf16.mxu0 0
  %271 = vmatpush2.bf16.msra.mxu0 0
  %272 = vmatprep.mubr.bf16.mxu0 0
  %273 = vmatmul.mubr.bf16.gmra.mxu0 %v235
  %v274 = vpop.f32.mrf.mxu0
  %v275 = vadd.f32 0.0, %v274
  %v276 = vpop.f32.mrf.mxu0
  %v277 = vpop.f32.mrf.mxu0
  %v278 = vadd.f32 0.0, %v277
  %v279 = vpop.f32.mrf.mxu0
  %280 = vmatprep.mubr.bf16.mxu0 0
  %281 = vmatmul.mubr.bf16.gmra.mxu0 %v238
  %v282 = vpop.f32.mrf.mxu0
  %v283 = vadd.f32 0.0, %v282
  %v284 = vpop.f32.mrf.mxu0
  %v285 = vpop.f32.mrf.mxu0
  %v286 = vadd.f32 0.0, %v285
  %v287 = vpop.f32.mrf.mxu0
  %288 = vdwg.mxu0
  %v289 = vadd.f32 %v199, %v275
  %v290 = vadd.f32 %v202, %v278
  %v291 = vadd.f32 %v207, %v283
  %v292 = vadd.f32 %v210, %v286
  %s293 = scalar_lea.vmem %s2, 48
  %v294 = vld [vmem:[%s293] sm:$0xf]
  %v295 = vld [vmem:[%s293 + $0x4] sm:$0xf]
  %v296 = vld [vmem:[%s293 + $0x8] sm:$0xf]
  %v297 = vld [vmem:[%s293 + $0xc] sm:$0xf]
  %v302 = vunpack.c.l.b16 %v294
  %v303 = vunpack.c.l.b16 %v295
  %v304 = vunpack.c.l.b16 %v296
  %v305 = vunpack.c.l.b16 %v297
  %v306 = vpack.c.b16 %v303, %v302
  %v307 = vpack.c.b16 %v305, %v304
  %308 = vrot.lane.b32.xlu0 %v63, 122
  %v309 = vpop.permute.xlu0 %308
  %310 = vrot.lane.b32.xlu0 %v64, 122
  %v311 = vpop.permute.xlu0 %310
  %v315 = vsel %vm92, %v306, 0
  %v318 = vsel %vm92, %v307, 0
  %320 = vmatprep.subr.bf16.mxu0 0
  %321 = vmatpush1.bf16.msra.mxu0 0
  %322 = vmatprep.subr.bf16.mxu0 0
  %323 = vmatpush1.bf16.msra.mxu0 0
  %324 = vmatprep.subr.bf16.mxu0 0
  %325 = vmatpush1.bf16.msra.mxu0 0
  %326 = vmatprep.subr.bf16.mxu0 0
  %327 = vmatpush1.bf16.msra.mxu0 0
  %328 = vmatprep.subr.bf16.mxu0 0
  %329 = vmatpush1.bf16.msra.mxu0 0
  %330 = vmatprep.subr.bf16.mxu0 0
  %331 = vmatpush1.bf16.msra.mxu0 0
  %332 = vmatprep.subr.bf16.mxu0 0
  %333 = vmatpush1.bf16.msra.mxu0 %v311
  %334 = vmatprep.subr.bf16.mxu0 0
  %335 = vmatpush1.bf16.msra.mxu0 %v309
  %336 = vmatprep.subr.bf16.mxu0 0
  %337 = vmatpush2.bf16.msra.mxu0 0
  %338 = vmatprep.subr.bf16.mxu0 0
  %339 = vmatpush2.bf16.msra.mxu0 0
  %340 = vmatprep.subr.bf16.mxu0 0
  %341 = vmatpush2.bf16.msra.mxu0 0
  %342 = vmatprep.subr.bf16.mxu0 0
  %343 = vmatpush2.bf16.msra.mxu0 0
  %344 = vmatprep.subr.bf16.mxu0 0
  %345 = vmatpush2.bf16.msra.mxu0 0
  %346 = vmatprep.subr.bf16.mxu0 0
  %347 = vmatpush2.bf16.msra.mxu0 0
  %348 = vmatprep.subr.bf16.mxu0 0
  %349 = vmatpush2.bf16.msra.mxu0 0
  %350 = vmatprep.subr.bf16.mxu0 0
  %351 = vmatpush2.bf16.msra.mxu0 0
  %352 = vmatprep.mubr.bf16.mxu0 0
  %353 = vmatmul.mubr.bf16.gmra.mxu0 %v315
  %v354 = vpop.f32.mrf.mxu0
  %v355 = vadd.f32 0.0, %v354
  %v356 = vpop.f32.mrf.mxu0
  %v357 = vpop.f32.mrf.mxu0
  %v358 = vadd.f32 0.0, %v357
  %v359 = vpop.f32.mrf.mxu0
  %360 = vmatprep.mubr.bf16.mxu0 0
  %361 = vmatmul.mubr.bf16.gmra.mxu0 %v318
  %v362 = vpop.f32.mrf.mxu0
  %v363 = vadd.f32 0.0, %v362
  %v364 = vpop.f32.mrf.mxu0
  %v365 = vpop.f32.mrf.mxu0
  %v366 = vadd.f32 0.0, %v365
  %v367 = vpop.f32.mrf.mxu0
  %368 = vdwg.mxu0
  %v369 = vadd.f32 %v289, %v355
  %v370 = vadd.f32 %v290, %v358
  %v371 = vadd.f32 %v291, %v363
  %v372 = vadd.f32 %v292, %v366
  %s373 = scalar_lea.vmem %s2, 64
  %v374 = vld [vmem:[%s373] sm:$0xf]
  %v375 = vld [vmem:[%s373 + $0x4] sm:$0xf]
  %v376 = vld [vmem:[%s373 + $0x8] sm:$0xf]
  %v377 = vld [vmem:[%s373 + $0xc] sm:$0xf]
  %v382 = vunpack.c.l.b16 %v374
  %v383 = vunpack.c.l.b16 %v375
  %v384 = vunpack.c.l.b16 %v376
  %v385 = vunpack.c.l.b16 %v377
  %v386 = vpack.c.b16 %v383, %v382
  %v387 = vpack.c.b16 %v385, %v384
  %388 = vrot.lane.b32.xlu0 %v63, 121
  %v389 = vpop.permute.xlu0 %388
  %390 = vrot.lane.b32.xlu0 %v64, 121
  %v391 = vpop.permute.xlu0 %390
  %v395 = vsel %vm92, %v386, 0
  %v398 = vsel %vm92, %v387, 0
  %400 = vmatprep.subr.bf16.mxu0 0
  %401 = vmatpush1.bf16.msra.mxu0 0
  %402 = vmatprep.subr.bf16.mxu0 0
  %403 = vmatpush1.bf16.msra.mxu0 0
  %404 = vmatprep.subr.bf16.mxu0 0
  %405 = vmatpush1.bf16.msra.mxu0 0
  %406 = vmatprep.subr.bf16.mxu0 0
  %407 = vmatpush1.bf16.msra.mxu0 0
  %408 = vmatprep.subr.bf16.mxu0 0
  %409 = vmatpush1.bf16.msra.mxu0 0
  %410 = vmatprep.subr.bf16.mxu0 0
  %411 = vmatpush1.bf16.msra.mxu0 0
  %412 = vmatprep.subr.bf16.mxu0 0
  %413 = vmatpush1.bf16.msra.mxu0 %v391
  %414 = vmatprep.subr.bf16.mxu0 0
  %415 = vmatpush1.bf16.msra.mxu0 %v389
  %416 = vmatprep.subr.bf16.mxu0 0
  %417 = vmatpush2.bf16.msra.mxu0 0
  %418 = vmatprep.subr.bf16.mxu0 0
  %419 = vmatpush2.bf16.msra.mxu0 0
  %420 = vmatprep.subr.bf16.mxu0 0
  %421 = vmatpush2.bf16.msra.mxu0 0
  %422 = vmatprep.subr.bf16.mxu0 0
  %423 = vmatpush2.bf16.msra.mxu0 0
  %424 = vmatprep.subr.bf16.mxu0 0
  %425 = vmatpush2.bf16.msra.mxu0 0
  %426 = vmatprep.subr.bf16.mxu0 0
  %427 = vmatpush2.bf16.msra.mxu0 0
  %428 = vmatprep.subr.bf16.mxu0 0
  %429 = vmatpush2.bf16.msra.mxu0 0
  %430 = vmatprep.subr.bf16.mxu0 0
  %431 = vmatpush2.bf16.msra.mxu0 0
  %432 = vmatprep.mubr.bf16.mxu0 0
  %433 = vmatmul.mubr.bf16.gmra.mxu0 %v395
  %v434 = vpop.f32.mrf.mxu0
  %v435 = vadd.f32 0.0, %v434
  %v436 = vpop.f32.mrf.mxu0
  %v437 = vpop.f32.mrf.mxu0
  %v438 = vadd.f32 0.0, %v437
  %v439 = vpop.f32.mrf.mxu0
  %440 = vmatprep.mubr.bf16.mxu0 0
  %441 = vmatmul.mubr.bf16.gmra.mxu0 %v398
  %v442 = vpop.f32.mrf.mxu0
  %v443 = vadd.f32 0.0, %v442
  %v444 = vpop.f32.mrf.mxu0
  %v445 = vpop.f32.mrf.mxu0
  %v446 = vadd.f32 0.0, %v445
  %v447 = vpop.f32.mrf.mxu0
  %448 = vdwg.mxu0
  %v449 = vadd.f32 %v369, %v435
  %v450 = vadd.f32 %v370, %v438
  %v451 = vadd.f32 %v371, %v443
  %v452 = vadd.f32 %v372, %v446
  %s453 = scalar_lea.vmem %s2, 80
  %v454 = vld [vmem:[%s453] sm:$0xf]
  %v455 = vld [vmem:[%s453 + $0x4] sm:$0xf]
  %v456 = vld [vmem:[%s453 + $0x8] sm:$0xf]
  %v457 = vld [vmem:[%s453 + $0xc] sm:$0xf]
  %v462 = vunpack.c.l.b16 %v454
  %v463 = vunpack.c.l.b16 %v455
  %v464 = vunpack.c.l.b16 %v456
  %v465 = vunpack.c.l.b16 %v457
  %v466 = vpack.c.b16 %v463, %v462
  %v467 = vpack.c.b16 %v465, %v464
  %468 = vrot.lane.b32.xlu0 %v63, 120
  %v469 = vpop.permute.xlu0 %468
  %470 = vrot.lane.b32.xlu0 %v64, 120
  %v471 = vpop.permute.xlu0 %470
  %v475 = vsel %vm92, %v466, 0
  %v478 = vsel %vm92, %v467, 0
  %480 = vmatprep.subr.bf16.mxu0 0
  %481 = vmatpush1.bf16.msra.mxu0 0
  %482 = vmatprep.subr.bf16.mxu0 0
  %483 = vmatpush1.bf16.msra.mxu0 0
  %484 = vmatprep.subr.bf16.mxu0 0
  %485 = vmatpush1.bf16.msra.mxu0 0
  %486 = vmatprep.subr.bf16.mxu0 0
  %487 = vmatpush1.bf16.msra.mxu0 0
  %488 = vmatprep.subr.bf16.mxu0 0
  %489 = vmatpush1.bf16.msra.mxu0 0
  %490 = vmatprep.subr.bf16.mxu0 0
  %491 = vmatpush1.bf16.msra.mxu0 0
  %492 = vmatprep.subr.bf16.mxu0 0
  %493 = vmatpush1.bf16.msra.mxu0 %v471
  %494 = vmatprep.subr.bf16.mxu0 0
  %495 = vmatpush1.bf16.msra.mxu0 %v469
  %496 = vmatprep.subr.bf16.mxu0 0
  %497 = vmatpush2.bf16.msra.mxu0 0
  %498 = vmatprep.subr.bf16.mxu0 0
  %499 = vmatpush2.bf16.msra.mxu0 0
  %500 = vmatprep.subr.bf16.mxu0 0
  %501 = vmatpush2.bf16.msra.mxu0 0
  %502 = vmatprep.subr.bf16.mxu0 0
  %503 = vmatpush2.bf16.msra.mxu0 0
  %504 = vmatprep.subr.bf16.mxu0 0
  %505 = vmatpush2.bf16.msra.mxu0 0
  %506 = vmatprep.subr.bf16.mxu0 0
  %507 = vmatpush2.bf16.msra.mxu0 0
  %508 = vmatprep.subr.bf16.mxu0 0
  %509 = vmatpush2.bf16.msra.mxu0 0
  %510 = vmatprep.subr.bf16.mxu0 0
  %511 = vmatpush2.bf16.msra.mxu0 0
  %512 = vmatprep.mubr.bf16.mxu0 0
  %513 = vmatmul.mubr.bf16.gmra.mxu0 %v475
  %v514 = vpop.f32.mrf.mxu0
  %v515 = vadd.f32 0.0, %v514
  %v516 = vpop.f32.mrf.mxu0
  %v517 = vpop.f32.mrf.mxu0
  %v518 = vadd.f32 0.0, %v517
  %v519 = vpop.f32.mrf.mxu0
  %520 = vmatprep.mubr.bf16.mxu0 0
  %521 = vmatmul.mubr.bf16.gmra.mxu0 %v478
  %v522 = vpop.f32.mrf.mxu0
  %v523 = vadd.f32 0.0, %v522
  %v524 = vpop.f32.mrf.mxu0
  %v525 = vpop.f32.mrf.mxu0
  %v526 = vadd.f32 0.0, %v525
  %v527 = vpop.f32.mrf.mxu0
  %528 = vdwg.mxu0
  %v529 = vadd.f32 %v449, %v515
  %v530 = vadd.f32 %v450, %v518
  %v531 = vadd.f32 %v451, %v523
  %v532 = vadd.f32 %v452, %v526
  %s533 = scalar_lea.vmem %s2, 96
  %v534 = vld [vmem:[%s533] sm:$0xf]
  %v535 = vld [vmem:[%s533 + $0x4] sm:$0xf]
  %v536 = vld [vmem:[%s533 + $0x8] sm:$0xf]
  %v537 = vld [vmem:[%s533 + $0xc] sm:$0xf]
  %v542 = vunpack.c.l.b16 %v534
  %v543 = vunpack.c.l.b16 %v535
  %v544 = vunpack.c.l.b16 %v536
  %v545 = vunpack.c.l.b16 %v537
  %v546 = vpack.c.b16 %v543, %v542
  %v547 = vpack.c.b16 %v545, %v544
  %548 = vrot.lane.b32.xlu0 %v63, 116
  %v549 = vpop.permute.xlu0 %548
  %550 = vrot.lane.b32.xlu0 %v64, 116
  %v551 = vpop.permute.xlu0 %550
  %v555 = vsel %vm92, %v546, 0
  %v558 = vsel %vm92, %v547, 0
  %560 = vmatprep.subr.bf16.mxu0 0
  %561 = vmatpush1.bf16.msra.mxu0 0
  %562 = vmatprep.subr.bf16.mxu0 0
  %563 = vmatpush1.bf16.msra.mxu0 0
  %564 = vmatprep.subr.bf16.mxu0 0
  %565 = vmatpush1.bf16.msra.mxu0 0
  %566 = vmatprep.subr.bf16.mxu0 0
  %567 = vmatpush1.bf16.msra.mxu0 0
  %568 = vmatprep.subr.bf16.mxu0 0
  %569 = vmatpush1.bf16.msra.mxu0 0
  %570 = vmatprep.subr.bf16.mxu0 0
  %571 = vmatpush1.bf16.msra.mxu0 0
  %572 = vmatprep.subr.bf16.mxu0 0
  %573 = vmatpush1.bf16.msra.mxu0 %v551
  %574 = vmatprep.subr.bf16.mxu0 0
  %575 = vmatpush1.bf16.msra.mxu0 %v549
  %576 = vmatprep.subr.bf16.mxu0 0
  %577 = vmatpush2.bf16.msra.mxu0 0
  %578 = vmatprep.subr.bf16.mxu0 0
  %579 = vmatpush2.bf16.msra.mxu0 0
  %580 = vmatprep.subr.bf16.mxu0 0
  %581 = vmatpush2.bf16.msra.mxu0 0
  %582 = vmatprep.subr.bf16.mxu0 0
  %583 = vmatpush2.bf16.msra.mxu0 0
  %584 = vmatprep.subr.bf16.mxu0 0
  %585 = vmatpush2.bf16.msra.mxu0 0
  %586 = vmatprep.subr.bf16.mxu0 0
  %587 = vmatpush2.bf16.msra.mxu0 0
  %588 = vmatprep.subr.bf16.mxu0 0
  %589 = vmatpush2.bf16.msra.mxu0 0
  %590 = vmatprep.subr.bf16.mxu0 0
  %591 = vmatpush2.bf16.msra.mxu0 0
  %592 = vmatprep.mubr.bf16.mxu0 0
  %593 = vmatmul.mubr.bf16.gmra.mxu0 %v555
  %v594 = vpop.f32.mrf.mxu0
  %v595 = vadd.f32 0.0, %v594
  %v596 = vpop.f32.mrf.mxu0
  %v597 = vpop.f32.mrf.mxu0
  %v598 = vadd.f32 0.0, %v597
  %v599 = vpop.f32.mrf.mxu0
  %600 = vmatprep.mubr.bf16.mxu0 0
  %601 = vmatmul.mubr.bf16.gmra.mxu0 %v558
  %v602 = vpop.f32.mrf.mxu0
  %v603 = vadd.f32 0.0, %v602
  %v604 = vpop.f32.mrf.mxu0
  %v605 = vpop.f32.mrf.mxu0
  %v606 = vadd.f32 0.0, %v605
  %v607 = vpop.f32.mrf.mxu0
  %608 = vdwg.mxu0
  %v609 = vadd.f32 %v529, %v595
  %v610 = vadd.f32 %v530, %v598
  %v611 = vadd.f32 %v531, %v603
  %v612 = vadd.f32 %v532, %v606
  %s613 = scalar_lea.vmem %s2, 112
  %v614 = vld [vmem:[%s613] sm:$0xf]
  %v615 = vld [vmem:[%s613 + $0x4] sm:$0xf]
  %v616 = vld [vmem:[%s613 + $0x8] sm:$0xf]
  %v617 = vld [vmem:[%s613 + $0xc] sm:$0xf]
  %v622 = vunpack.c.l.b16 %v614
  %v623 = vunpack.c.l.b16 %v615
  %v624 = vunpack.c.l.b16 %v616
  %v625 = vunpack.c.l.b16 %v617
  %v626 = vpack.c.b16 %v623, %v622
  %v627 = vpack.c.b16 %v625, %v624
  %628 = vrot.lane.b32.xlu0 %v63, 115
  %v629 = vpop.permute.xlu0 %628
  %630 = vrot.lane.b32.xlu0 %v64, 115
  %v631 = vpop.permute.xlu0 %630
  %v635 = vsel %vm92, %v626, 0
  %v638 = vsel %vm92, %v627, 0
  %640 = vmatprep.subr.bf16.mxu0 0
  %641 = vmatpush1.bf16.msra.mxu0 0
  %642 = vmatprep.subr.bf16.mxu0 0
  %643 = vmatpush1.bf16.msra.mxu0 0
  %644 = vmatprep.subr.bf16.mxu0 0
  %645 = vmatpush1.bf16.msra.mxu0 0
  %646 = vmatprep.subr.bf16.mxu0 0
  %647 = vmatpush1.bf16.msra.mxu0 0
  %648 = vmatprep.subr.bf16.mxu0 0
  %649 = vmatpush1.bf16.msra.mxu0 0
  %650 = vmatprep.subr.bf16.mxu0 0
  %651 = vmatpush1.bf16.msra.mxu0 0
  %652 = vmatprep.subr.bf16.mxu0 0
  %653 = vmatpush1.bf16.msra.mxu0 %v631
  %654 = vmatprep.subr.bf16.mxu0 0
  %655 = vmatpush1.bf16.msra.mxu0 %v629
  %656 = vmatprep.subr.bf16.mxu0 0
  %657 = vmatpush2.bf16.msra.mxu0 0
  %658 = vmatprep.subr.bf16.mxu0 0
  %659 = vmatpush2.bf16.msra.mxu0 0
  %660 = vmatprep.subr.bf16.mxu0 0
  %661 = vmatpush2.bf16.msra.mxu0 0
  %662 = vmatprep.subr.bf16.mxu0 0
  %663 = vmatpush2.bf16.msra.mxu0 0
  %664 = vmatprep.subr.bf16.mxu0 0
  %665 = vmatpush2.bf16.msra.mxu0 0
  %666 = vmatprep.subr.bf16.mxu0 0
  %667 = vmatpush2.bf16.msra.mxu0 0
  %668 = vmatprep.subr.bf16.mxu0 0
  %669 = vmatpush2.bf16.msra.mxu0 0
  %670 = vmatprep.subr.bf16.mxu0 0
  %671 = vmatpush2.bf16.msra.mxu0 0
  %672 = vmatprep.mubr.bf16.mxu0 0
  %673 = vmatmul.mubr.bf16.gmra.mxu0 %v635
  %v674 = vpop.f32.mrf.mxu0
  %v675 = vadd.f32 0.0, %v674
  %v676 = vpop.f32.mrf.mxu0
  %v677 = vpop.f32.mrf.mxu0
  %v678 = vadd.f32 0.0, %v677
  %v679 = vpop.f32.mrf.mxu0
  %680 = vmatprep.mubr.bf16.mxu0 0
  %681 = vmatmul.mubr.bf16.gmra.mxu0 %v638
  %v682 = vpop.f32.mrf.mxu0
  %v683 = vadd.f32 0.0, %v682
  %v684 = vpop.f32.mrf.mxu0
  %v685 = vpop.f32.mrf.mxu0
  %v686 = vadd.f32 0.0, %v685
  %v687 = vpop.f32.mrf.mxu0
  %688 = vdwg.mxu0
  %v689 = vadd.f32 %v609, %v675
  %v690 = vadd.f32 %v610, %v678
  %v691 = vadd.f32 %v611, %v683
  %v692 = vadd.f32 %v612, %v686
  %s693 = scalar_lea.vmem %s2, 128
  %v694 = vld [vmem:[%s693] sm:$0xf]
  %v695 = vld [vmem:[%s693 + $0x4] sm:$0xf]
  %v696 = vld [vmem:[%s693 + $0x8] sm:$0xf]
  %v697 = vld [vmem:[%s693 + $0xc] sm:$0xf]
  %v702 = vunpack.c.l.b16 %v694
  %v703 = vunpack.c.l.b16 %v695
  %v704 = vunpack.c.l.b16 %v696
  %v705 = vunpack.c.l.b16 %v697
  %v706 = vpack.c.b16 %v703, %v702
  %v707 = vpack.c.b16 %v705, %v704
  %708 = vrot.lane.b32.xlu0 %v63, 114
  %v709 = vpop.permute.xlu0 %708
  %710 = vrot.lane.b32.xlu0 %v64, 114
  %v711 = vpop.permute.xlu0 %710
  %v715 = vsel %vm92, %v706, 0
  %v718 = vsel %vm92, %v707, 0
  %720 = vmatprep.subr.bf16.mxu0 0
  %721 = vmatpush1.bf16.msra.mxu0 0
  %722 = vmatprep.subr.bf16.mxu0 0
  %723 = vmatpush1.bf16.msra.mxu0 0
  %724 = vmatprep.subr.bf16.mxu0 0
  %725 = vmatpush1.bf16.msra.mxu0 0
  %726 = vmatprep.subr.bf16.mxu0 0
  %727 = vmatpush1.bf16.msra.mxu0 0
  %728 = vmatprep.subr.bf16.mxu0 0
  %729 = vmatpush1.bf16.msra.mxu0 0
  %730 = vmatprep.subr.bf16.mxu0 0
  %731 = vmatpush1.bf16.msra.mxu0 0
  %732 = vmatprep.subr.bf16.mxu0 0
  %733 = vmatpush1.bf16.msra.mxu0 %v711
  %734 = vmatprep.subr.bf16.mxu0 0
  %735 = vmatpush1.bf16.msra.mxu0 %v709
  %736 = vmatprep.subr.bf16.mxu0 0
  %737 = vmatpush2.bf16.msra.mxu0 0
  %738 = vmatprep.subr.bf16.mxu0 0
  %739 = vmatpush2.bf16.msra.mxu0 0
  %740 = vmatprep.subr.bf16.mxu0 0
  %741 = vmatpush2.bf16.msra.mxu0 0
  %742 = vmatprep.subr.bf16.mxu0 0
  %743 = vmatpush2.bf16.msra.mxu0 0
  %744 = vmatprep.subr.bf16.mxu0 0
  %745 = vmatpush2.bf16.msra.mxu0 0
  %746 = vmatprep.subr.bf16.mxu0 0
  %747 = vmatpush2.bf16.msra.mxu0 0
  %748 = vmatprep.subr.bf16.mxu0 0
  %749 = vmatpush2.bf16.msra.mxu0 0
  %750 = vmatprep.subr.bf16.mxu0 0
  %751 = vmatpush2.bf16.msra.mxu0 0
  %752 = vmatprep.mubr.bf16.mxu0 0
  %753 = vmatmul.mubr.bf16.gmra.mxu0 %v715
  %v754 = vpop.f32.mrf.mxu0
  %v755 = vadd.f32 0.0, %v754
  %v756 = vpop.f32.mrf.mxu0
  %v757 = vpop.f32.mrf.mxu0
  %v758 = vadd.f32 0.0, %v757
  %v759 = vpop.f32.mrf.mxu0
  %760 = vmatprep.mubr.bf16.mxu0 0
  %761 = vmatmul.mubr.bf16.gmra.mxu0 %v718
  %v762 = vpop.f32.mrf.mxu0
  %v763 = vadd.f32 0.0, %v762
  %v764 = vpop.f32.mrf.mxu0
  %v765 = vpop.f32.mrf.mxu0
  %v766 = vadd.f32 0.0, %v765
  %v767 = vpop.f32.mrf.mxu0
  %768 = vdwg.mxu0
  %v769 = vadd.f32 %v689, %v755
  %v770 = vadd.f32 %v690, %v758
  %v771 = vadd.f32 %v691, %v763
  %v772 = vadd.f32 %v692, %v766
  %v773 = vld [vmem:[%s3] sm:$0xff]
  %v774 = vld [vmem:[%s3 + $0x8] sm:$0xff]
  %v775 = vld [vmem:[%s3 + $0x10] sm:$0xff]
  %v776 = vld [vmem:[%s3 + $0x18] sm:$0xff]
  %778 = vset.pattern.permute.xlu0 0
  %779 = vperm.xlu0 %778, %v773
  %v780 = vpop.permute.xlu0 %779
  %783 = vset.pattern.permute.xlu0 0
  %784 = vperm.xlu0 %783, %v774
  %v785 = vpop.permute.xlu0 %784
  %788 = vset.pattern.permute.xlu0 0
  %789 = vperm.xlu0 %788, %v775
  %v790 = vpop.permute.xlu0 %789
  %793 = vset.pattern.permute.xlu0 0
  %794 = vperm.xlu0 %793, %v776
  %v795 = vpop.permute.xlu0 %794
  %v797 = vadd.f32 %v769, %v780
  %v798 = vadd.f32 %v770, %v785
  %v799 = vadd.f32 %v771, %v790
  %v800 = vadd.f32 %v772, %v795
  %v801 = vmax.f32 %v797, 0.0
  %v802 = vmax.f32 %v798, 0.0
  %v803 = vmax.f32 %v799, 0.0
  %v804 = vmax.f32 %v800, 0.0
  %v805 = vpack.c.bf16 %v802, %v801
  %v806 = vpack.c.bf16 %v804, %v803
  %v807 = vld [vmem:[%s4] sm:$0xf]
  %v808 = vld [vmem:[%s4 + $0x4] sm:$0xf]
  %v809 = vld [vmem:[%s4 + $0x8] sm:$0xf]
  %v810 = vld [vmem:[%s4 + $0xc] sm:$0xf]
  %v811 = vld [vmem:[%s5] sm:$0xff]
  %v812 = vld [vmem:[%s5 + $0x8] sm:$0xff]
  %v813 = vld [vmem:[%s5 + $0x10] sm:$0xff]
  %v814 = vld [vmem:[%s5 + $0x18] sm:$0xff]
  %816 = vset.pattern.permute.xlu0 0
  %817 = vperm.xlu0 %816, %v811
  %v818 = vpop.permute.xlu0 %817
  %821 = vset.pattern.permute.xlu0 0
  %822 = vperm.xlu0 %821, %v812
  %v823 = vpop.permute.xlu0 %822
  %826 = vset.pattern.permute.xlu0 0
  %827 = vperm.xlu0 %826, %v813
  %v828 = vpop.permute.xlu0 %827
  %831 = vset.pattern.permute.xlu0 0
  %832 = vperm.xlu0 %831, %v814
  %v833 = vpop.permute.xlu0 %832
  %v839 = vunpack.c.l.b16 %v807
  %v840 = vunpack.c.l.b16 %v808
  %v841 = vunpack.c.l.b16 %v809
  %v842 = vunpack.c.l.b16 %v810
  %v843 = vpack.c.b16 %v840, %v839
  %v844 = vpack.c.b16 %v842, %v841
  %v846 = vsel %vm92, %v843, 0
  %v849 = vsel %vm92, %v844, 0
  %851 = vmatprep.subr.bf16.mxu0 0
  %852 = vmatpush1.bf16.msra.mxu0 0
  %853 = vmatprep.subr.bf16.mxu0 0
  %854 = vmatpush1.bf16.msra.mxu0 0
  %855 = vmatprep.subr.bf16.mxu0 0
  %856 = vmatpush1.bf16.msra.mxu0 0
  %857 = vmatprep.subr.bf16.mxu0 0
  %858 = vmatpush1.bf16.msra.mxu0 0
  %859 = vmatprep.subr.bf16.mxu0 0
  %860 = vmatpush1.bf16.msra.mxu0 0
  %861 = vmatprep.subr.bf16.mxu0 0
  %862 = vmatpush1.bf16.msra.mxu0 0
  %863 = vmatprep.subr.bf16.mxu0 0
  %864 = vmatpush1.bf16.msra.mxu0 %v806
  %865 = vmatprep.subr.bf16.mxu0 0
  %866 = vmatpush1.bf16.msra.mxu0 %v805
  %867 = vmatprep.subr.bf16.mxu0 0
  %868 = vmatpush2.bf16.msra.mxu0 0
  %869 = vmatprep.subr.bf16.mxu0 0
  %870 = vmatpush2.bf16.msra.mxu0 0
  %871 = vmatprep.subr.bf16.mxu0 0
  %872 = vmatpush2.bf16.msra.mxu0 0
  %873 = vmatprep.subr.bf16.mxu0 0
  %874 = vmatpush2.bf16.msra.mxu0 0
  %875 = vmatprep.subr.bf16.mxu0 0
  %876 = vmatpush2.bf16.msra.mxu0 0
  %877 = vmatprep.subr.bf16.mxu0 0
  %878 = vmatpush2.bf16.msra.mxu0 0
  %879 = vmatprep.subr.bf16.mxu0 0
  %880 = vmatpush2.bf16.msra.mxu0 0
  %881 = vmatprep.subr.bf16.mxu0 0
  %882 = vmatpush2.bf16.msra.mxu0 0
  %883 = vmatprep.mubr.bf16.mxu0 0
  %884 = vmatmul.mubr.bf16.gmra.mxu0 %v846
  %v885 = vpop.f32.mrf.mxu0
  %v886 = vadd.f32 %v818, %v885
  %v887 = vpop.f32.mrf.mxu0
  %v888 = vpop.f32.mrf.mxu0
  %v889 = vadd.f32 %v823, %v888
  %v890 = vpop.f32.mrf.mxu0
  %891 = vmatprep.mubr.bf16.mxu0 0
  %892 = vmatmul.mubr.bf16.gmra.mxu0 %v849
  %v893 = vpop.f32.mrf.mxu0
  %v894 = vadd.f32 %v828, %v893
  %v895 = vpop.f32.mrf.mxu0
  %v896 = vpop.f32.mrf.mxu0
  %v897 = vadd.f32 %v833, %v896
  %v898 = vpop.f32.mrf.mxu0
  %899 = vdwg.mxu0
  %904 = vrot.lane.b32.xlu0 %v55, 121
  %v905 = vpop.permute.xlu0 %904
  %906 = vrot.lane.b32.xlu0 %v56, 121
  %v907 = vpop.permute.xlu0 %906
  %908 = vrot.lane.b32.xlu0 %v57, 121
  %v909 = vpop.permute.xlu0 %908
  %910 = vrot.lane.b32.xlu0 %v58, 121
  %v911 = vpop.permute.xlu0 %910
  %v916 = vadd.f32 %v886, %v905
  %v917 = vadd.f32 %v889, %v907
  %v918 = vadd.f32 %v894, %v909
  %v919 = vadd.f32 %v897, %v911
  %v921 = vlaneseq
  %v922 = vshrl.u32 %v921, 7
  %v923 = vsub.s32 0, %v922
  %v924 = vrot.slane %v54, %v923
  %v926 = vmul.f32 %v916, %v924
  %v927 = vmul.f32 %v917, %v924
  %v928 = vmul.f32 %v918, %v924
  %v929 = vmul.f32 %v919, %v924
  %934 = vrot.lane.b32.xlu0 %v926, 7
  %v935 = vpop.permute.xlu0 %934
  %936 = vrot.lane.b32.xlu0 %v927, 7
  %v937 = vpop.permute.xlu0 %936
  %938 = vrot.lane.b32.xlu0 %v928, 7
  %v939 = vpop.permute.xlu0 %938
  %940 = vrot.lane.b32.xlu0 %v929, 7
  %v941 = vpop.permute.xlu0 %940
  %946 = vst.msk [vmem:[#allocation2] sm:$0xff] %vm49, %v935
  %947 = vst.msk [vmem:[#allocation2 + $0x8] sm:$0xff] %vm49, %v937
  %948 = vst.msk [vmem:[#allocation2 + $0x10] sm:$0xff] %vm49, %v939
  %949 = vst.msk [vmem:[#allocation2 + $0x18] sm:$0xff] %vm49, %v941
  %v950 = vld [vmem:[#allocation2] sm:$0xff]
  %v951 = vld [vmem:[#allocation2 + $0x8] sm:$0xff]
  %v952 = vld [vmem:[#allocation2 + $0x10] sm:$0xff]
  %v953 = vld [vmem:[#allocation2 + $0x18] sm:$0xff]
  %v954 = vmax.f32 %v950, 0.0
  %v955 = vmax.f32 %v951, 0.0
  %v956 = vmax.f32 %v952, 0.0
  %v957 = vmax.f32 %v953, 0.0
  %v958 = vpack.c.bf16 %v955, %v954
  %v959 = vpack.c.bf16 %v957, %v956
  %s960 = scalar_lea.vmem %s2, 144
  %v961 = vld [vmem:[%s960] sm:$0xf]
  %v962 = vld [vmem:[%s960 + $0x4] sm:$0xf]
  %v963 = vld [vmem:[%s960 + $0x8] sm:$0xf]
  %v964 = vld [vmem:[%s960 + $0xc] sm:$0xf]
  %s965 = scalar_lea.vmem %s2, 160
  %v966 = vld [vmem:[%s965] sm:$0xf]
  %v967 = vld [vmem:[%s965 + $0x4] sm:$0xf]
  %v968 = vld [vmem:[%s965 + $0x8] sm:$0xf]
  %v969 = vld [vmem:[%s965 + $0xc] sm:$0xf]
  %v974 = vunpack.c.l.b16 %v966
  %v975 = vunpack.c.l.b16 %v967
  %v976 = vunpack.c.l.b16 %v968
  %v977 = vunpack.c.l.b16 %v969
  %v978 = vpack.c.b16 %v975, %v974
  %v979 = vpack.c.b16 %v977, %v976
  %982 = vrot.lane.b32.xlu0 %v958, 127
  %v983 = vpop.permute.xlu0 %982
  %984 = vrot.lane.b32.xlu0 %v959, 127
  %v985 = vpop.permute.xlu0 %984
  %v989 = vsel %vm92, %v978, 0
  %v992 = vsel %vm92, %v979, 0
  %994 = vmatprep.subr.bf16.mxu0 0
  %995 = vmatpush1.bf16.msra.mxu0 0
  %996 = vmatprep.subr.bf16.mxu0 0
  %997 = vmatpush1.bf16.msra.mxu0 0
  %998 = vmatprep.subr.bf16.mxu0 0
  %999 = vmatpush1.bf16.msra.mxu0 0
  %1000 = vmatprep.subr.bf16.mxu0 0
  %1001 = vmatpush1.bf16.msra.mxu0 0
  %1002 = vmatprep.subr.bf16.mxu0 0
  %1003 = vmatpush1.bf16.msra.mxu0 0
  %1004 = vmatprep.subr.bf16.mxu0 0
  %1005 = vmatpush1.bf16.msra.mxu0 0
  %1006 = vmatprep.subr.bf16.mxu0 0
  %1007 = vmatpush1.bf16.msra.mxu0 %v985
  %1008 = vmatprep.subr.bf16.mxu0 0
  %1009 = vmatpush1.bf16.msra.mxu0 %v983
  %1010 = vmatprep.subr.bf16.mxu0 0
  %1011 = vmatpush2.bf16.msra.mxu0 0
  %1012 = vmatprep.subr.bf16.mxu0 0
  %1013 = vmatpush2.bf16.msra.mxu0 0
  %1014 = vmatprep.subr.bf16.mxu0 0
  %1015 = vmatpush2.bf16.msra.mxu0 0
  %1016 = vmatprep.subr.bf16.mxu0 0
  %1017 = vmatpush2.bf16.msra.mxu0 0
  %1018 = vmatprep.subr.bf16.mxu0 0
  %1019 = vmatpush2.bf16.msra.mxu0 0
  %1020 = vmatprep.subr.bf16.mxu0 0
  %1021 = vmatpush2.bf16.msra.mxu0 0
  %1022 = vmatprep.subr.bf16.mxu0 0
  %1023 = vmatpush2.bf16.msra.mxu0 0
  %1024 = vmatprep.subr.bf16.mxu0 0
  %1025 = vmatpush2.bf16.msra.mxu0 0
  %1026 = vmatprep.mubr.bf16.mxu0 0
  %1027 = vmatmul.mubr.bf16.gmra.mxu0 %v989
  %v1028 = vpop.f32.mrf.mxu0
  %v1029 = vadd.f32 0.0, %v1028
  %v1030 = vpop.f32.mrf.mxu0
  %v1031 = vpop.f32.mrf.mxu0
  %v1032 = vadd.f32 0.0, %v1031
  %v1033 = vpop.f32.mrf.mxu0
  %1034 = vmatprep.mubr.bf16.mxu0 0
  %1035 = vmatmul.mubr.bf16.gmra.mxu0 %v992
  %v1036 = vpop.f32.mrf.mxu0
  %v1037 = vadd.f32 0.0, %v1036
  %v1038 = vpop.f32.mrf.mxu0
  %v1039 = vpop.f32.mrf.mxu0
  %v1040 = vadd.f32 0.0, %v1039
  %v1041 = vpop.f32.mrf.mxu0
  %1042 = vdwg.mxu0
  %v1047 = vunpack.c.l.b16 %v961
  %v1048 = vunpack.c.l.b16 %v962
  %v1049 = vunpack.c.l.b16 %v963
  %v1050 = vunpack.c.l.b16 %v964
  %v1051 = vpack.c.b16 %v1048, %v1047
  %v1052 = vpack.c.b16 %v1050, %v1049
  %v1054 = vsel %vm92, %v1051, 0
  %v1057 = vsel %vm92, %v1052, 0
  %1059 = vmatprep.subr.bf16.mxu0 0
  %1060 = vmatpush1.bf16.msra.mxu0 0
  %1061 = vmatprep.subr.bf16.mxu0 0
  %1062 = vmatpush1.bf16.msra.mxu0 0
  %1063 = vmatprep.subr.bf16.mxu0 0
  %1064 = vmatpush1.bf16.msra.mxu0 0
  %1065 = vmatprep.subr.bf16.mxu0 0
  %1066 = vmatpush1.bf16.msra.mxu0 0
  %1067 = vmatprep.subr.bf16.mxu0 0
  %1068 = vmatpush1.bf16.msra.mxu0 0
  %1069 = vmatprep.subr.bf16.mxu0 0
  %1070 = vmatpush1.bf16.msra.mxu0 0
  %1071 = vmatprep.subr.bf16.mxu0 0
  %1072 = vmatpush1.bf16.msra.mxu0 %v959
  %1073 = vmatprep.subr.bf16.mxu0 0
  %1074 = vmatpush1.bf16.msra.mxu0 %v958
  %1075 = vmatprep.subr.bf16.mxu0 0
  %1076 = vmatpush2.bf16.msra.mxu0 0
  %1077 = vmatprep.subr.bf16.mxu0 0
  %1078 = vmatpush2.bf16.msra.mxu0 0
  %1079 = vmatprep.subr.bf16.mxu0 0
  %1080 = vmatpush2.bf16.msra.mxu0 0
  %1081 = vmatprep.subr.bf16.mxu0 0
  %1082 = vmatpush2.bf16.msra.mxu0 0
  %1083 = vmatprep.subr.bf16.mxu0 0
  %1084 = vmatpush2.bf16.msra.mxu0 0
  %1085 = vmatprep.subr.bf16.mxu0 0
  %1086 = vmatpush2.bf16.msra.mxu0 0
  %1087 = vmatprep.subr.bf16.mxu0 0
  %1088 = vmatpush2.bf16.msra.mxu0 0
  %1089 = vmatprep.subr.bf16.mxu0 0
  %1090 = vmatpush2.bf16.msra.mxu0 0
  %1091 = vmatprep.mubr.bf16.mxu0 0
  %1092 = vmatmul.mubr.bf16.gmra.mxu0 %v1054
  %v1093 = vpop.f32.mrf.mxu0
  %v1094 = vadd.f32 %v1029, %v1093
  %v1095 = vpop.f32.mrf.mxu0
  %v1096 = vpop.f32.mrf.mxu0
  %v1097 = vadd.f32 %v1032, %v1096
  %v1098 = vpop.f32.mrf.mxu0
  %1099 = vmatprep.mubr.bf16.mxu0 0
  %1100 = vmatmul.mubr.bf16.gmra.mxu0 %v1057
  %v1101 = vpop.f32.mrf.mxu0
  %v1102 = vadd.f32 %v1037, %v1101
  %v1103 = vpop.f32.mrf.mxu0
  %v1104 = vpop.f32.mrf.mxu0
  %v1105 = vadd.f32 %v1040, %v1104
  %v1106 = vpop.f32.mrf.mxu0
  %1107 = vdwg.mxu0
  %s1108 = scalar_lea.vmem %s2, 176
  %v1109 = vld [vmem:[%s1108] sm:$0xf]
  %v1110 = vld [vmem:[%s1108 + $0x4] sm:$0xf]
  %v1111 = vld [vmem:[%s1108 + $0x8] sm:$0xf]
  %v1112 = vld [vmem:[%s1108 + $0xc] sm:$0xf]
  %v1117 = vunpack.c.l.b16 %v1109
  %v1118 = vunpack.c.l.b16 %v1110
  %v1119 = vunpack.c.l.b16 %v1111
  %v1120 = vunpack.c.l.b16 %v1112
  %v1121 = vpack.c.b16 %v1118, %v1117
  %v1122 = vpack.c.b16 %v1120, %v1119
  %1123 = vrot.lane.b32.xlu0 %v958, 126
  %v1124 = vpop.permute.xlu0 %1123
  %1125 = vrot.lane.b32.xlu0 %v959, 126
  %v1126 = vpop.permute.xlu0 %1125
  %v1130 = vsel %vm92, %v1121, 0
  %v1133 = vsel %vm92, %v1122, 0
  %1135 = vmatprep.subr.bf16.mxu0 0
  %1136 = vmatpush1.bf16.msra.mxu0 0
  %1137 = vmatprep.subr.bf16.mxu0 0
  %1138 = vmatpush1.bf16.msra.mxu0 0
  %1139 = vmatprep.subr.bf16.mxu0 0
  %1140 = vmatpush1.bf16.msra.mxu0 0
  %1141 = vmatprep.subr.bf16.mxu0 0
  %1142 = vmatpush1.bf16.msra.mxu0 0
  %1143 = vmatprep.subr.bf16.mxu0 0
  %1144 = vmatpush1.bf16.msra.mxu0 0
  %1145 = vmatprep.subr.bf16.mxu0 0
  %1146 = vmatpush1.bf16.msra.mxu0 0
  %1147 = vmatprep.subr.bf16.mxu0 0
  %1148 = vmatpush1.bf16.msra.mxu0 %v1126
  %1149 = vmatprep.subr.bf16.mxu0 0
  %1150 = vmatpush1.bf16.msra.mxu0 %v1124
  %1151 = vmatprep.subr.bf16.mxu0 0
  %1152 = vmatpush2.bf16.msra.mxu0 0
  %1153 = vmatprep.subr.bf16.mxu0 0
  %1154 = vmatpush2.bf16.msra.mxu0 0
  %1155 = vmatprep.subr.bf16.mxu0 0
  %1156 = vmatpush2.bf16.msra.mxu0 0
  %1157 = vmatprep.subr.bf16.mxu0 0
  %1158 = vmatpush2.bf16.msra.mxu0 0
  %1159 = vmatprep.subr.bf16.mxu0 0
  %1160 = vmatpush2.bf16.msra.mxu0 0
  %1161 = vmatprep.subr.bf16.mxu0 0
  %1162 = vmatpush2.bf16.msra.mxu0 0
  %1163 = vmatprep.subr.bf16.mxu0 0
  %1164 = vmatpush2.bf16.msra.mxu0 0
  %1165 = vmatprep.subr.bf16.mxu0 0
  %1166 = vmatpush2.bf16.msra.mxu0 0
  %1167 = vmatprep.mubr.bf16.mxu0 0
  %1168 = vmatmul.mubr.bf16.gmra.mxu0 %v1130
  %v1169 = vpop.f32.mrf.mxu0
  %v1170 = vadd.f32 0.0, %v1169
  %v1171 = vpop.f32.mrf.mxu0
  %v1172 = vpop.f32.mrf.mxu0
  %v1173 = vadd.f32 0.0, %v1172
  %v1174 = vpop.f32.mrf.mxu0
  %1175 = vmatprep.mubr.bf16.mxu0 0
  %1176 = vmatmul.mubr.bf16.gmra.mxu0 %v1133
  %v1177 = vpop.f32.mrf.mxu0
  %v1178 = vadd.f32 0.0, %v1177
  %v1179 = vpop.f32.mrf.mxu0
  %v1180 = vpop.f32.mrf.mxu0
  %v1181 = vadd.f32 0.0, %v1180
  %v1182 = vpop.f32.mrf.mxu0
  %1183 = vdwg.mxu0
  %v1184 = vadd.f32 %v1094, %v1170
  %v1185 = vadd.f32 %v1097, %v1173
  %v1186 = vadd.f32 %v1102, %v1178
  %v1187 = vadd.f32 %v1105, %v1181
  %s1188 = scalar_lea.vmem %s2, 192
  %v1189 = vld [vmem:[%s1188] sm:$0xf]
  %v1190 = vld [vmem:[%s1188 + $0x4] sm:$0xf]
  %v1191 = vld [vmem:[%s1188 + $0x8] sm:$0xf]
  %v1192 = vld [vmem:[%s1188 + $0xc] sm:$0xf]
  %v1197 = vunpack.c.l.b16 %v1189
  %v1198 = vunpack.c.l.b16 %v1190
  %v1199 = vunpack.c.l.b16 %v1191
  %v1200 = vunpack.c.l.b16 %v1192
  %v1201 = vpack.c.b16 %v1198, %v1197
  %v1202 = vpack.c.b16 %v1200, %v1199
  %1203 = vrot.lane.b32.xlu0 %v958, 122
  %v1204 = vpop.permute.xlu0 %1203
  %1205 = vrot.lane.b32.xlu0 %v959, 122
  %v1206 = vpop.permute.xlu0 %1205
  %v1210 = vsel %vm92, %v1201, 0
  %v1213 = vsel %vm92, %v1202, 0
  %1215 = vmatprep.subr.bf16.mxu0 0
  %1216 = vmatpush1.bf16.msra.mxu0 0
  %1217 = vmatprep.subr.bf16.mxu0 0
  %1218 = vmatpush1.bf16.msra.mxu0 0
  %1219 = vmatprep.subr.bf16.mxu0 0
  %1220 = vmatpush1.bf16.msra.mxu0 0
  %1221 = vmatprep.subr.bf16.mxu0 0
  %1222 = vmatpush1.bf16.msra.mxu0 0
  %1223 = vmatprep.subr.bf16.mxu0 0
  %1224 = vmatpush1.bf16.msra.mxu0 0
  %1225 = vmatprep.subr.bf16.mxu0 0
  %1226 = vmatpush1.bf16.msra.mxu0 0
  %1227 = vmatprep.subr.bf16.mxu0 0
  %1228 = vmatpush1.bf16.msra.mxu0 %v1206
  %1229 = vmatprep.subr.bf16.mxu0 0
  %1230 = vmatpush1.bf16.msra.mxu0 %v1204
  %1231 = vmatprep.subr.bf16.mxu0 0
  %1232 = vmatpush2.bf16.msra.mxu0 0
  %1233 = vmatprep.subr.bf16.mxu0 0
  %1234 = vmatpush2.bf16.msra.mxu0 0
  %1235 = vmatprep.subr.bf16.mxu0 0
  %1236 = vmatpush2.bf16.msra.mxu0 0
  %1237 = vmatprep.subr.bf16.mxu0 0
  %1238 = vmatpush2.bf16.msra.mxu0 0
  %1239 = vmatprep.subr.bf16.mxu0 0
  %1240 = vmatpush2.bf16.msra.mxu0 0
  %1241 = vmatprep.subr.bf16.mxu0 0
  %1242 = vmatpush2.bf16.msra.mxu0 0
  %1243 = vmatprep.subr.bf16.mxu0 0
  %1244 = vmatpush2.bf16.msra.mxu0 0
  %1245 = vmatprep.subr.bf16.mxu0 0
  %1246 = vmatpush2.bf16.msra.mxu0 0
  %1247 = vmatprep.mubr.bf16.mxu0 0
  %1248 = vmatmul.mubr.bf16.gmra.mxu0 %v1210
  %v1249 = vpop.f32.mrf.mxu0
  %v1250 = vadd.f32 0.0, %v1249
  %v1251 = vpop.f32.mrf.mxu0
  %v1252 = vpop.f32.mrf.mxu0
  %v1253 = vadd.f32 0.0, %v1252
  %v1254 = vpop.f32.mrf.mxu0
  %1255 = vmatprep.mubr.bf16.mxu0 0
  %1256 = vmatmul.mubr.bf16.gmra.mxu0 %v1213
  %v1257 = vpop.f32.mrf.mxu0
  %v1258 = vadd.f32 0.0, %v1257
  %v1259 = vpop.f32.mrf.mxu0
  %v1260 = vpop.f32.mrf.mxu0
  %v1261 = vadd.f32 0.0, %v1260
  %v1262 = vpop.f32.mrf.mxu0
  %1263 = vdwg.mxu0
  %v1264 = vadd.f32 %v1184, %v1250
  %v1265 = vadd.f32 %v1185, %v1253
  %v1266 = vadd.f32 %v1186, %v1258
  %v1267 = vadd.f32 %v1187, %v1261
  %s1268 = scalar_lea.vmem %s2, 208
  %v1269 = vld [vmem:[%s1268] sm:$0xf]
  %v1270 = vld [vmem:[%s1268 + $0x4] sm:$0xf]
  %v1271 = vld [vmem:[%s1268 + $0x8] sm:$0xf]
  %v1272 = vld [vmem:[%s1268 + $0xc] sm:$0xf]
  %v1277 = vunpack.c.l.b16 %v1269
  %v1278 = vunpack.c.l.b16 %v1270
  %v1279 = vunpack.c.l.b16 %v1271
  %v1280 = vunpack.c.l.b16 %v1272
  %v1281 = vpack.c.b16 %v1278, %v1277
  %v1282 = vpack.c.b16 %v1280, %v1279
  %1283 = vrot.lane.b32.xlu0 %v958, 121
  %v1284 = vpop.permute.xlu0 %1283
  %1285 = vrot.lane.b32.xlu0 %v959, 121
  %v1286 = vpop.permute.xlu0 %1285
  %v1290 = vsel %vm92, %v1281, 0
  %v1293 = vsel %vm92, %v1282, 0
  %1295 = vmatprep.subr.bf16.mxu0 0
  %1296 = vmatpush1.bf16.msra.mxu0 0
  %1297 = vmatprep.subr.bf16.mxu0 0
  %1298 = vmatpush1.bf16.msra.mxu0 0
  %1299 = vmatprep.subr.bf16.mxu0 0
  %1300 = vmatpush1.bf16.msra.mxu0 0
  %1301 = vmatprep.subr.bf16.mxu0 0
  %1302 = vmatpush1.bf16.msra.mxu0 0
  %1303 = vmatprep.subr.bf16.mxu0 0
  %1304 = vmatpush1.bf16.msra.mxu0 0
  %1305 = vmatprep.subr.bf16.mxu0 0
  %1306 = vmatpush1.bf16.msra.mxu0 0
  %1307 = vmatprep.subr.bf16.mxu0 0
  %1308 = vmatpush1.bf16.msra.mxu0 %v1286
  %1309 = vmatprep.subr.bf16.mxu0 0
  %1310 = vmatpush1.bf16.msra.mxu0 %v1284
  %1311 = vmatprep.subr.bf16.mxu0 0
  %1312 = vmatpush2.bf16.msra.mxu0 0
  %1313 = vmatprep.subr.bf16.mxu0 0
  %1314 = vmatpush2.bf16.msra.mxu0 0
  %1315 = vmatprep.subr.bf16.mxu0 0
  %1316 = vmatpush2.bf16.msra.mxu0 0
  %1317 = vmatprep.subr.bf16.mxu0 0
  %1318 = vmatpush2.bf16.msra.mxu0 0
  %1319 = vmatprep.subr.bf16.mxu0 0
  %1320 = vmatpush2.bf16.msra.mxu0 0
  %1321 = vmatprep.subr.bf16.mxu0 0
  %1322 = vmatpush2.bf16.msra.mxu0 0
  %1323 = vmatprep.subr.bf16.mxu0 0
  %1324 = vmatpush2.bf16.msra.mxu0 0
  %1325 = vmatprep.subr.bf16.mxu0 0
  %1326 = vmatpush2.bf16.msra.mxu0 0
  %1327 = vmatprep.mubr.bf16.mxu0 0
  %1328 = vmatmul.mubr.bf16.gmra.mxu0 %v1290
  %v1329 = vpop.f32.mrf.mxu0
  %v1330 = vadd.f32 0.0, %v1329
  %v1331 = vpop.f32.mrf.mxu0
  %v1332 = vpop.f32.mrf.mxu0
  %v1333 = vadd.f32 0.0, %v1332
  %v1334 = vpop.f32.mrf.mxu0
  %1335 = vmatprep.mubr.bf16.mxu0 0
  %1336 = vmatmul.mubr.bf16.gmra.mxu0 %v1293
  %v1337 = vpop.f32.mrf.mxu0
  %v1338 = vadd.f32 0.0, %v1337
  %v1339 = vpop.f32.mrf.mxu0
  %v1340 = vpop.f32.mrf.mxu0
  %v1341 = vadd.f32 0.0, %v1340
  %v1342 = vpop.f32.mrf.mxu0
  %1343 = vdwg.mxu0
  %v1344 = vadd.f32 %v1264, %v1330
  %v1345 = vadd.f32 %v1265, %v1333
  %v1346 = vadd.f32 %v1266, %v1338
  %v1347 = vadd.f32 %v1267, %v1341
  %s1348 = scalar_lea.vmem %s2, 224
  %v1349 = vld [vmem:[%s1348] sm:$0xf]
  %v1350 = vld [vmem:[%s1348 + $0x4] sm:$0xf]
  %v1351 = vld [vmem:[%s1348 + $0x8] sm:$0xf]
  %v1352 = vld [vmem:[%s1348 + $0xc] sm:$0xf]
  %v1357 = vunpack.c.l.b16 %v1349
  %v1358 = vunpack.c.l.b16 %v1350
  %v1359 = vunpack.c.l.b16 %v1351
  %v1360 = vunpack.c.l.b16 %v1352
  %v1361 = vpack.c.b16 %v1358, %v1357
  %v1362 = vpack.c.b16 %v1360, %v1359
  %1363 = vrot.lane.b32.xlu0 %v958, 120
  %v1364 = vpop.permute.xlu0 %1363
  %1365 = vrot.lane.b32.xlu0 %v959, 120
  %v1366 = vpop.permute.xlu0 %1365
  %v1370 = vsel %vm92, %v1361, 0
  %v1373 = vsel %vm92, %v1362, 0
  %1375 = vmatprep.subr.bf16.mxu0 0
  %1376 = vmatpush1.bf16.msra.mxu0 0
  %1377 = vmatprep.subr.bf16.mxu0 0
  %1378 = vmatpush1.bf16.msra.mxu0 0
  %1379 = vmatprep.subr.bf16.mxu0 0
  %1380 = vmatpush1.bf16.msra.mxu0 0
  %1381 = vmatprep.subr.bf16.mxu0 0
  %1382 = vmatpush1.bf16.msra.mxu0 0
  %1383 = vmatprep.subr.bf16.mxu0 0
  %1384 = vmatpush1.bf16.msra.mxu0 0
  %1385 = vmatprep.subr.bf16.mxu0 0
  %1386 = vmatpush1.bf16.msra.mxu0 0
  %1387 = vmatprep.subr.bf16.mxu0 0
  %1388 = vmatpush1.bf16.msra.mxu0 %v1366
  %1389 = vmatprep.subr.bf16.mxu0 0
  %1390 = vmatpush1.bf16.msra.mxu0 %v1364
  %1391 = vmatprep.subr.bf16.mxu0 0
  %1392 = vmatpush2.bf16.msra.mxu0 0
  %1393 = vmatprep.subr.bf16.mxu0 0
  %1394 = vmatpush2.bf16.msra.mxu0 0
  %1395 = vmatprep.subr.bf16.mxu0 0
  %1396 = vmatpush2.bf16.msra.mxu0 0
  %1397 = vmatprep.subr.bf16.mxu0 0
  %1398 = vmatpush2.bf16.msra.mxu0 0
  %1399 = vmatprep.subr.bf16.mxu0 0
  %1400 = vmatpush2.bf16.msra.mxu0 0
  %1401 = vmatprep.subr.bf16.mxu0 0
  %1402 = vmatpush2.bf16.msra.mxu0 0
  %1403 = vmatprep.subr.bf16.mxu0 0
  %1404 = vmatpush2.bf16.msra.mxu0 0
  %1405 = vmatprep.subr.bf16.mxu0 0
  %1406 = vmatpush2.bf16.msra.mxu0 0
  %1407 = vmatprep.mubr.bf16.mxu0 0
  %1408 = vmatmul.mubr.bf16.gmra.mxu0 %v1370
  %v1409 = vpop.f32.mrf.mxu0
  %v1410 = vadd.f32 0.0, %v1409
  %v1411 = vpop.f32.mrf.mxu0
  %v1412 = vpop.f32.mrf.mxu0
  %v1413 = vadd.f32 0.0, %v1412
  %v1414 = vpop.f32.mrf.mxu0
  %1415 = vmatprep.mubr.bf16.mxu0 0
  %1416 = vmatmul.mubr.bf16.gmra.mxu0 %v1373
  %v1417 = vpop.f32.mrf.mxu0
  %v1418 = vadd.f32 0.0, %v1417
  %v1419 = vpop.f32.mrf.mxu0
  %v1420 = vpop.f32.mrf.mxu0
  %v1421 = vadd.f32 0.0, %v1420
  %v1422 = vpop.f32.mrf.mxu0
  %1423 = vdwg.mxu0
  %v1424 = vadd.f32 %v1344, %v1410
  %v1425 = vadd.f32 %v1345, %v1413
  %v1426 = vadd.f32 %v1346, %v1418
  %v1427 = vadd.f32 %v1347, %v1421
  %s1428 = scalar_lea.vmem %s2, 240
  %v1429 = vld [vmem:[%s1428] sm:$0xf]
  %v1430 = vld [vmem:[%s1428 + $0x4] sm:$0xf]
  %v1431 = vld [vmem:[%s1428 + $0x8] sm:$0xf]
  %v1432 = vld [vmem:[%s1428 + $0xc] sm:$0xf]
  %v1437 = vunpack.c.l.b16 %v1429
  %v1438 = vunpack.c.l.b16 %v1430
  %v1439 = vunpack.c.l.b16 %v1431
  %v1440 = vunpack.c.l.b16 %v1432
  %v1441 = vpack.c.b16 %v1438, %v1437
  %v1442 = vpack.c.b16 %v1440, %v1439
  %1443 = vrot.lane.b32.xlu0 %v958, 116
  %v1444 = vpop.permute.xlu0 %1443
  %1445 = vrot.lane.b32.xlu0 %v959, 116
  %v1446 = vpop.permute.xlu0 %1445
  %v1450 = vsel %vm92, %v1441, 0
  %v1453 = vsel %vm92, %v1442, 0
  %1455 = vmatprep.subr.bf16.mxu0 0
  %1456 = vmatpush1.bf16.msra.mxu0 0
  %1457 = vmatprep.subr.bf16.mxu0 0
  %1458 = vmatpush1.bf16.msra.mxu0 0
  %1459 = vmatprep.subr.bf16.mxu0 0
  %1460 = vmatpush1.bf16.msra.mxu0 0
  %1461 = vmatprep.subr.bf16.mxu0 0
  %1462 = vmatpush1.bf16.msra.mxu0 0
  %1463 = vmatprep.subr.bf16.mxu0 0
  %1464 = vmatpush1.bf16.msra.mxu0 0
  %1465 = vmatprep.subr.bf16.mxu0 0
  %1466 = vmatpush1.bf16.msra.mxu0 0
  %1467 = vmatprep.subr.bf16.mxu0 0
  %1468 = vmatpush1.bf16.msra.mxu0 %v1446
  %1469 = vmatprep.subr.bf16.mxu0 0
  %1470 = vmatpush1.bf16.msra.mxu0 %v1444
  %1471 = vmatprep.subr.bf16.mxu0 0
  %1472 = vmatpush2.bf16.msra.mxu0 0
  %1473 = vmatprep.subr.bf16.mxu0 0
  %1474 = vmatpush2.bf16.msra.mxu0 0
  %1475 = vmatprep.subr.bf16.mxu0 0
  %1476 = vmatpush2.bf16.msra.mxu0 0
  %1477 = vmatprep.subr.bf16.mxu0 0
  %1478 = vmatpush2.bf16.msra.mxu0 0
  %1479 = vmatprep.subr.bf16.mxu0 0
  %1480 = vmatpush2.bf16.msra.mxu0 0
  %1481 = vmatprep.subr.bf16.mxu0 0
  %1482 = vmatpush2.bf16.msra.mxu0 0
  %1483 = vmatprep.subr.bf16.mxu0 0
  %1484 = vmatpush2.bf16.msra.mxu0 0
  %1485 = vmatprep.subr.bf16.mxu0 0
  %1486 = vmatpush2.bf16.msra.mxu0 0
  %1487 = vmatprep.mubr.bf16.mxu0 0
  %1488 = vmatmul.mubr.bf16.gmra.mxu0 %v1450
  %v1489 = vpop.f32.mrf.mxu0
  %v1490 = vadd.f32 0.0, %v1489
  %v1491 = vpop.f32.mrf.mxu0
  %v1492 = vpop.f32.mrf.mxu0
  %v1493 = vadd.f32 0.0, %v1492
  %v1494 = vpop.f32.mrf.mxu0
  %1495 = vmatprep.mubr.bf16.mxu0 0
  %1496 = vmatmul.mubr.bf16.gmra.mxu0 %v1453
  %v1497 = vpop.f32.mrf.mxu0
  %v1498 = vadd.f32 0.0, %v1497
  %v1499 = vpop.f32.mrf.mxu0
  %v1500 = vpop.f32.mrf.mxu0
  %v1501 = vadd.f32 0.0, %v1500
  %v1502 = vpop.f32.mrf.mxu0
  %1503 = vdwg.mxu0
  %v1504 = vadd.f32 %v1424, %v1490
  %v1505 = vadd.f32 %v1425, %v1493
  %v1506 = vadd.f32 %v1426, %v1498
  %v1507 = vadd.f32 %v1427, %v1501
  %s1508 = scalar_lea.vmem %s2, 256
  %v1509 = vld [vmem:[%s1508] sm:$0xf]
  %v1510 = vld [vmem:[%s1508 + $0x4] sm:$0xf]
  %v1511 = vld [vmem:[%s1508 + $0x8] sm:$0xf]
  %v1512 = vld [vmem:[%s1508 + $0xc] sm:$0xf]
  %v1517 = vunpack.c.l.b16 %v1509
  %v1518 = vunpack.c.l.b16 %v1510
  %v1519 = vunpack.c.l.b16 %v1511
  %v1520 = vunpack.c.l.b16 %v1512
  %v1521 = vpack.c.b16 %v1518, %v1517
  %v1522 = vpack.c.b16 %v1520, %v1519
  %1523 = vrot.lane.b32.xlu0 %v958, 115
  %v1524 = vpop.permute.xlu0 %1523
  %1525 = vrot.lane.b32.xlu0 %v959, 115
  %v1526 = vpop.permute.xlu0 %1525
  %v1530 = vsel %vm92, %v1521, 0
  %v1533 = vsel %vm92, %v1522, 0
  %1535 = vmatprep.subr.bf16.mxu0 0
  %1536 = vmatpush1.bf16.msra.mxu0 0
  %1537 = vmatprep.subr.bf16.mxu0 0
  %1538 = vmatpush1.bf16.msra.mxu0 0
  %1539 = vmatprep.subr.bf16.mxu0 0
  %1540 = vmatpush1.bf16.msra.mxu0 0
  %1541 = vmatprep.subr.bf16.mxu0 0
  %1542 = vmatpush1.bf16.msra.mxu0 0
  %1543 = vmatprep.subr.bf16.mxu0 0
  %1544 = vmatpush1.bf16.msra.mxu0 0
  %1545 = vmatprep.subr.bf16.mxu0 0
  %1546 = vmatpush1.bf16.msra.mxu0 0
  %1547 = vmatprep.subr.bf16.mxu0 0
  %1548 = vmatpush1.bf16.msra.mxu0 %v1526
  %1549 = vmatprep.subr.bf16.mxu0 0
  %1550 = vmatpush1.bf16.msra.mxu0 %v1524
  %1551 = vmatprep.subr.bf16.mxu0 0
  %1552 = vmatpush2.bf16.msra.mxu0 0
  %1553 = vmatprep.subr.bf16.mxu0 0
  %1554 = vmatpush2.bf16.msra.mxu0 0
  %1555 = vmatprep.subr.bf16.mxu0 0
  %1556 = vmatpush2.bf16.msra.mxu0 0
  %1557 = vmatprep.subr.bf16.mxu0 0
  %1558 = vmatpush2.bf16.msra.mxu0 0
  %1559 = vmatprep.subr.bf16.mxu0 0
  %1560 = vmatpush2.bf16.msra.mxu0 0
  %1561 = vmatprep.subr.bf16.mxu0 0
  %1562 = vmatpush2.bf16.msra.mxu0 0
  %1563 = vmatprep.subr.bf16.mxu0 0
  %1564 = vmatpush2.bf16.msra.mxu0 0
  %1565 = vmatprep.subr.bf16.mxu0 0
  %1566 = vmatpush2.bf16.msra.mxu0 0
  %1567 = vmatprep.mubr.bf16.mxu0 0
  %1568 = vmatmul.mubr.bf16.gmra.mxu0 %v1530
  %v1569 = vpop.f32.mrf.mxu0
  %v1570 = vadd.f32 0.0, %v1569
  %v1571 = vpop.f32.mrf.mxu0
  %v1572 = vpop.f32.mrf.mxu0
  %v1573 = vadd.f32 0.0, %v1572
  %v1574 = vpop.f32.mrf.mxu0
  %1575 = vmatprep.mubr.bf16.mxu0 0
  %1576 = vmatmul.mubr.bf16.gmra.mxu0 %v1533
  %v1577 = vpop.f32.mrf.mxu0
  %v1578 = vadd.f32 0.0, %v1577
  %v1579 = vpop.f32.mrf.mxu0
  %v1580 = vpop.f32.mrf.mxu0
  %v1581 = vadd.f32 0.0, %v1580
  %v1582 = vpop.f32.mrf.mxu0
  %1583 = vdwg.mxu0
  %v1584 = vadd.f32 %v1504, %v1570
  %v1585 = vadd.f32 %v1505, %v1573
  %v1586 = vadd.f32 %v1506, %v1578
  %v1587 = vadd.f32 %v1507, %v1581
  %s1588 = scalar_lea.vmem %s2, 272
  %v1589 = vld [vmem:[%s1588] sm:$0xf]
  %v1590 = vld [vmem:[%s1588 + $0x4] sm:$0xf]
  %v1591 = vld [vmem:[%s1588 + $0x8] sm:$0xf]
  %v1592 = vld [vmem:[%s1588 + $0xc] sm:$0xf]
  %v1597 = vunpack.c.l.b16 %v1589
  %v1598 = vunpack.c.l.b16 %v1590
  %v1599 = vunpack.c.l.b16 %v1591
  %v1600 = vunpack.c.l.b16 %v1592
  %v1601 = vpack.c.b16 %v1598, %v1597
  %v1602 = vpack.c.b16 %v1600, %v1599
  %1603 = vrot.lane.b32.xlu0 %v958, 114
  %v1604 = vpop.permute.xlu0 %1603
  %1605 = vrot.lane.b32.xlu0 %v959, 114
  %v1606 = vpop.permute.xlu0 %1605
  %v1610 = vsel %vm92, %v1601, 0
  %v1613 = vsel %vm92, %v1602, 0
  %1615 = vmatprep.subr.bf16.mxu0 0
  %1616 = vmatpush1.bf16.msra.mxu0 0
  %1617 = vmatprep.subr.bf16.mxu0 0
  %1618 = vmatpush1.bf16.msra.mxu0 0
  %1619 = vmatprep.subr.bf16.mxu0 0
  %1620 = vmatpush1.bf16.msra.mxu0 0
  %1621 = vmatprep.subr.bf16.mxu0 0
  %1622 = vmatpush1.bf16.msra.mxu0 0
  %1623 = vmatprep.subr.bf16.mxu0 0
  %1624 = vmatpush1.bf16.msra.mxu0 0
  %1625 = vmatprep.subr.bf16.mxu0 0
  %1626 = vmatpush1.bf16.msra.mxu0 0
  %1627 = vmatprep.subr.bf16.mxu0 0
  %1628 = vmatpush1.bf16.msra.mxu0 %v1606
  %1629 = vmatprep.subr.bf16.mxu0 0
  %1630 = vmatpush1.bf16.msra.mxu0 %v1604
  %1631 = vmatprep.subr.bf16.mxu0 0
  %1632 = vmatpush2.bf16.msra.mxu0 0
  %1633 = vmatprep.subr.bf16.mxu0 0
  %1634 = vmatpush2.bf16.msra.mxu0 0
  %1635 = vmatprep.subr.bf16.mxu0 0
  %1636 = vmatpush2.bf16.msra.mxu0 0
  %1637 = vmatprep.subr.bf16.mxu0 0
  %1638 = vmatpush2.bf16.msra.mxu0 0
  %1639 = vmatprep.subr.bf16.mxu0 0
  %1640 = vmatpush2.bf16.msra.mxu0 0
  %1641 = vmatprep.subr.bf16.mxu0 0
  %1642 = vmatpush2.bf16.msra.mxu0 0
  %1643 = vmatprep.subr.bf16.mxu0 0
  %1644 = vmatpush2.bf16.msra.mxu0 0
  %1645 = vmatprep.subr.bf16.mxu0 0
  %1646 = vmatpush2.bf16.msra.mxu0 0
  %1647 = vmatprep.mubr.bf16.mxu0 0
  %1648 = vmatmul.mubr.bf16.gmra.mxu0 %v1610
  %v1649 = vpop.f32.mrf.mxu0
  %v1650 = vadd.f32 0.0, %v1649
  %v1651 = vpop.f32.mrf.mxu0
  %v1652 = vpop.f32.mrf.mxu0
  %v1653 = vadd.f32 0.0, %v1652
  %v1654 = vpop.f32.mrf.mxu0
  %1655 = vmatprep.mubr.bf16.mxu0 0
  %1656 = vmatmul.mubr.bf16.gmra.mxu0 %v1613
  %v1657 = vpop.f32.mrf.mxu0
  %v1658 = vadd.f32 0.0, %v1657
  %v1659 = vpop.f32.mrf.mxu0
  %v1660 = vpop.f32.mrf.mxu0
  %v1661 = vadd.f32 0.0, %v1660
  %v1662 = vpop.f32.mrf.mxu0
  %1663 = vdwg.mxu0
  %v1664 = vadd.f32 %v1584, %v1650
  %v1665 = vadd.f32 %v1585, %v1653
  %v1666 = vadd.f32 %v1586, %v1658
  %v1667 = vadd.f32 %v1587, %v1661
  %s1668 = scalar_lea.vmem %s3, 32
  %v1669 = vld [vmem:[%s1668] sm:$0xff]
  %v1670 = vld [vmem:[%s1668 + $0x8] sm:$0xff]
  %v1671 = vld [vmem:[%s1668 + $0x10] sm:$0xff]
  %v1672 = vld [vmem:[%s1668 + $0x18] sm:$0xff]
  %1674 = vset.pattern.permute.xlu0 0
  %1675 = vperm.xlu0 %1674, %v1669
  %v1676 = vpop.permute.xlu0 %1675
  %1679 = vset.pattern.permute.xlu0 0
  %1680 = vperm.xlu0 %1679, %v1670
  %v1681 = vpop.permute.xlu0 %1680
  %1684 = vset.pattern.permute.xlu0 0
  %1685 = vperm.xlu0 %1684, %v1671
  %v1686 = vpop.permute.xlu0 %1685
  %1689 = vset.pattern.permute.xlu0 0
  %1690 = vperm.xlu0 %1689, %v1672
  %v1691 = vpop.permute.xlu0 %1690
  %v1693 = vadd.f32 %v1664, %v1676
  %v1694 = vadd.f32 %v1665, %v1681
  %v1695 = vadd.f32 %v1666, %v1686
  %v1696 = vadd.f32 %v1667, %v1691
  %v1697 = vmax.f32 %v1693, 0.0
  %v1698 = vmax.f32 %v1694, 0.0
  %v1699 = vmax.f32 %v1695, 0.0
  %v1700 = vmax.f32 %v1696, 0.0
  %v1701 = vpack.c.bf16 %v1698, %v1697
  %v1702 = vpack.c.bf16 %v1700, %v1699
  %s1703 = scalar_lea.vmem %s4, 16
  %v1704 = vld [vmem:[%s1703] sm:$0xf]
  %v1705 = vld [vmem:[%s1703 + $0x4] sm:$0xf]
  %v1706 = vld [vmem:[%s1703 + $0x8] sm:$0xf]
  %v1707 = vld [vmem:[%s1703 + $0xc] sm:$0xf]
  %s1708 = scalar_lea.vmem %s5, 32
  %v1709 = vld [vmem:[%s1708] sm:$0xff]
  %v1710 = vld [vmem:[%s1708 + $0x8] sm:$0xff]
  %v1711 = vld [vmem:[%s1708 + $0x10] sm:$0xff]
  %v1712 = vld [vmem:[%s1708 + $0x18] sm:$0xff]
  %1714 = vset.pattern.permute.xlu0 0
  %1715 = vperm.xlu0 %1714, %v1709
  %v1716 = vpop.permute.xlu0 %1715
  %1719 = vset.pattern.permute.xlu0 0
  %1720 = vperm.xlu0 %1719, %v1710
  %v1721 = vpop.permute.xlu0 %1720
  %1724 = vset.pattern.permute.xlu0 0
  %1725 = vperm.xlu0 %1724, %v1711
  %v1726 = vpop.permute.xlu0 %1725
  %1729 = vset.pattern.permute.xlu0 0
  %1730 = vperm.xlu0 %1729, %v1712
  %v1731 = vpop.permute.xlu0 %1730
  %v1737 = vunpack.c.l.b16 %v1704
  %v1738 = vunpack.c.l.b16 %v1705
  %v1739 = vunpack.c.l.b16 %v1706
  %v1740 = vunpack.c.l.b16 %v1707
  %v1741 = vpack.c.b16 %v1738, %v1737
  %v1742 = vpack.c.b16 %v1740, %v1739
  %v1744 = vsel %vm92, %v1741, 0
  %v1747 = vsel %vm92, %v1742, 0
  %1749 = vmatprep.subr.bf16.mxu0 0
  %1750 = vmatpush1.bf16.msra.mxu0 0
  %1751 = vmatprep.subr.bf16.mxu0 0
  %1752 = vmatpush1.bf16.msra.mxu0 0
  %1753 = vmatprep.subr.bf16.mxu0 0
  %1754 = vmatpush1.bf16.msra.mxu0 0
  %1755 = vmatprep.subr.bf16.mxu0 0
  %1756 = vmatpush1.bf16.msra.mxu0 0
  %1757 = vmatprep.subr.bf16.mxu0 0
  %1758 = vmatpush1.bf16.msra.mxu0 0
  %1759 = vmatprep.subr.bf16.mxu0 0
  %1760 = vmatpush1.bf16.msra.mxu0 0
  %1761 = vmatprep.subr.bf16.mxu0 0
  %1762 = vmatpush1.bf16.msra.mxu0 %v1702
  %1763 = vmatprep.subr.bf16.mxu0 0
  %1764 = vmatpush1.bf16.msra.mxu0 %v1701
  %1765 = vmatprep.subr.bf16.mxu0 0
  %1766 = vmatpush2.bf16.msra.mxu0 0
  %1767 = vmatprep.subr.bf16.mxu0 0
  %1768 = vmatpush2.bf16.msra.mxu0 0
  %1769 = vmatprep.subr.bf16.mxu0 0
  %1770 = vmatpush2.bf16.msra.mxu0 0
  %1771 = vmatprep.subr.bf16.mxu0 0
  %1772 = vmatpush2.bf16.msra.mxu0 0
  %1773 = vmatprep.subr.bf16.mxu0 0
  %1774 = vmatpush2.bf16.msra.mxu0 0
  %1775 = vmatprep.subr.bf16.mxu0 0
  %1776 = vmatpush2.bf16.msra.mxu0 0
  %1777 = vmatprep.subr.bf16.mxu0 0
  %1778 = vmatpush2.bf16.msra.mxu0 0
  %1779 = vmatprep.subr.bf16.mxu0 0
  %1780 = vmatpush2.bf16.msra.mxu0 0
  %1781 = vmatprep.mubr.bf16.mxu0 0
  %1782 = vmatmul.mubr.bf16.gmra.mxu0 %v1744
  %v1783 = vpop.f32.mrf.mxu0
  %v1784 = vadd.f32 %v1716, %v1783
  %v1785 = vpop.f32.mrf.mxu0
  %v1786 = vpop.f32.mrf.mxu0
  %v1787 = vadd.f32 %v1721, %v1786
  %v1788 = vpop.f32.mrf.mxu0
  %1789 = vmatprep.mubr.bf16.mxu0 0
  %1790 = vmatmul.mubr.bf16.gmra.mxu0 %v1747
  %v1791 = vpop.f32.mrf.mxu0
  %v1792 = vadd.f32 %v1726, %v1791
  %v1793 = vpop.f32.mrf.mxu0
  %v1794 = vpop.f32.mrf.mxu0
  %v1795 = vadd.f32 %v1731, %v1794
  %v1796 = vpop.f32.mrf.mxu0
  %1797 = vdwg.mxu0
  %1802 = vrot.lane.b32.xlu0 %v950, 121
  %v1803 = vpop.permute.xlu0 %1802
  %1804 = vrot.lane.b32.xlu0 %v951, 121
  %v1805 = vpop.permute.xlu0 %1804
  %1806 = vrot.lane.b32.xlu0 %v952, 121
  %v1807 = vpop.permute.xlu0 %1806
  %1808 = vrot.lane.b32.xlu0 %v953, 121
  %v1809 = vpop.permute.xlu0 %1808
  %v1814 = vadd.f32 %v1784, %v1803
  %v1815 = vadd.f32 %v1787, %v1805
  %v1816 = vadd.f32 %v1792, %v1807
  %v1817 = vadd.f32 %v1795, %v1809
  %v1818 = vmul.f32 %v1814, %v924
  %v1819 = vmul.f32 %v1815, %v924
  %v1820 = vmul.f32 %v1816, %v924
  %v1821 = vmul.f32 %v1817, %v924
  %1826 = vrot.lane.b32.xlu0 %v1818, 7
  %v1827 = vpop.permute.xlu0 %1826
  %1828 = vrot.lane.b32.xlu0 %v1819, 7
  %v1829 = vpop.permute.xlu0 %1828
  %1830 = vrot.lane.b32.xlu0 %v1820, 7
  %v1831 = vpop.permute.xlu0 %1830
  %1832 = vrot.lane.b32.xlu0 %v1821, 7
  %v1833 = vpop.permute.xlu0 %1832
  %1838 = vst.msk [vmem:[#allocation2] sm:$0xff] %vm49, %v1827
  %1839 = vst.msk [vmem:[#allocation2 + $0x8] sm:$0xff] %vm49, %v1829
  %1840 = vst.msk [vmem:[#allocation2 + $0x10] sm:$0xff] %vm49, %v1831
  %1841 = vst.msk [vmem:[#allocation2 + $0x18] sm:$0xff] %vm49, %v1833
  %v1842 = vld [vmem:[#allocation2] sm:$0xff]
  %v1843 = vld [vmem:[#allocation2 + $0x8] sm:$0xff]
  %v1844 = vld [vmem:[#allocation2 + $0x10] sm:$0xff]
  %v1845 = vld [vmem:[#allocation2 + $0x18] sm:$0xff]
  %1850 = vrot.lane.b32.xlu0 %v1842, 121
  %v1851 = vpop.permute.xlu0 %1850
  %1852 = vrot.lane.b32.xlu0 %v1843, 121
  %v1853 = vpop.permute.xlu0 %1852
  %1854 = vrot.lane.b32.xlu0 %v1844, 121
  %v1855 = vpop.permute.xlu0 %1854
  %1856 = vrot.lane.b32.xlu0 %v1845, 121
  %v1857 = vpop.permute.xlu0 %1856
  %vm1862 = vcmask 588800
  %1863 = vst.msk [vmem:[%s6] sm:$0xff] %vm1862, %v1851
  %1864 = vst.msk [vmem:[%s6 + $0x8] sm:$0xff] %vm1862, %v1853
  %1865 = vst.msk [vmem:[%s6 + $0x10] sm:$0xff] %vm1862, %v1855
  %1866 = vst.msk [vmem:[%s6 + $0x18] sm:$0xff] %vm1862, %v1857
  // Predicated region
  $region26: #{encoder_forward.5} parent=0 // pred_check
    _
  $region27: #{encoder_forward.5} parent=0 // pred_check_branch
    %1868 = sbr.rel (0) target = $region29
  $region28: #{encoder_forward.5} parent=0 // pred_region
    _
  $region29: #{encoder_forward.5} parent=0 // pred_fallthru
    _
  // Predicated region
  $region30: #{encoder_forward.5} parent=0 // pred_check
    _
  $region31: #{encoder_forward.5} parent=0 // pred_check_branch
    %1870 = sbr.rel (0) target = $region33
  $region32: #{encoder_forward.5} parent=0 // pred_region
    _
  $region33: #{encoder_forward.5} parent=0 // pred_fallthru
    _

</llo_original>
